<compile_context>
chip_gen: v6e
topology: v6e:2x2x1
jax: 0.10.0
libtpu: 0.0.40
codegen_flags: <defaults>
</compile_context>

<pallas_src>
import functools
import math

import jax
import jax.numpy as jnp
from jax.experimental import pallas as pl
from jax.experimental.pallas import tpu as pltpu

_LANE = 128


def _round_up(v, m):
    return (v + m - 1) // m * m


# Parity/shift options on the half-resolution grid, shared by the stride-2 down
# conv and the parity-plane form of the final up conv: (parity, row/col shift).
_OPTS = ((1, -1), (0, 0), (1, 0), (0, 1))


def _taps_stride2():
    """Stride-2 3x3 conv re-expressed on the 4 spatial-parity planes of x."""
    return tuple((2 * pr + pc, sh, sw)
                 for (pr, sh) in _OPTS[:3] for (pc, sw) in _OPTS[:3])


def _taps_stride1():
    return tuple((0, ky - 1, kx - 1) for ky in range(3) for kx in range(3))


def _taps_up2():
    """3x3 conv on the pixel-shuffled image, expressed on the 4 parity planes of
    its input (conv_up1 output stored parity-major), producing 4 parity output
    planes.  16 'union' (plane, row-shift, col-shift) taps; the weight matrix
    routes each output plane to the 9 it actually uses."""
    return tuple((2 * pr + pc, sh, sw) for (pr, sh) in _OPTS for (pc, sw) in _OPTS)


# ------------------------------ fused kernel --------------------------------

def _symmetric_kernel(x_ref, mask_ref,
                      w1_ref, b1_ref, w2_ref, b2_ref,
                      w3_ref, b3_ref, w4_ref, b4_ref,
                      dw1_ref, db1_ref, dw2_ref, db2_ref,
                      uw1_ref, ub1_ref, uw2_ref, ub2_ref,
                      o_ref,
                      ys_ref, y3_ref, pr_ref,
                      *, C, wp, hwp, band, hw_d, hw_u,
                      taps_s2, taps_s1, taps_u2):
    cd = C // 2
    mask = mask_ref[...]                       # (1, hwp), 1.0 at valid pixel lanes

    # Zero the side bands of the activation slabs (once per image) so shifted
    # tap windows read zeros at the image borders -- no per-tap masks needed.
    ys_ref[:, 0:band] = jnp.zeros((cd, band), jnp.float32)
    ys_ref[:, band + hwp:] = jnp.zeros((cd, band), jnp.float32)
    y3_ref[:, 0:band] = jnp.zeros((4 * cd, band), jnp.float32)
    y3_ref[:, band + hwp:] = jnp.zeros((4 * cd, band), jnp.float32)

    def conv(src_ref, taps, cin, w_ref, b_ref):
        # im2col taps = statically shifted lane windows of the zero-banded
        # source slab, assembled straight into persistent VMEM scratch.
        for t, (grp, sh, sw) in enumerate(taps):
            off = band + sh * wp + sw
            pr_ref[t * cin:(t + 1) * cin, :] = (
                src_ref[grp * cin:(grp + 1) * cin, off:off + hwp])
        k = len(taps) * cin
        return jnp.dot(w_ref[...], pr_ref[0:k, :],
                       preferred_element_type=jnp.float32) + b_ref[...]

    def mish(v):
        # x*tanh(softplus(x)) == x*u*(u+2)/(u*(u+2)+2), u=exp(x): one EUP exp +
        # one reciprocal.  Clamp keeps u*(u+2) finite; for v>20 the ratio is 1
        # to f32 precision (exact reciprocal keeps the 1e-4 self-check valid).
        u = jnp.exp(jnp.minimum(v, 20.0))
        num = u * (u + 2.0)
        return v * num * pl.reciprocal(num + 2.0, approx=False)

    def se_scale(pool, w1, b1, w2t, b2):
        # Tiny FC head as broadcast-multiply + cross-sublane / cross-lane
        # reduces (no transposes, no N=1 matmuls).  pool: (cd, 1).
        h = jnp.sum(w1[...] * pool, axis=0, keepdims=True) + b1[...]      # (1, cs)
        h = jnp.maximum(h, 0.0)
        z = jnp.sum(w2t[...] * h, axis=1, keepdims=True) + b2[...]        # (cd, 1)
        return jax.nn.sigmoid(z)

    # ---- down path: conv3x3 s2 -> Mish -> SE -> conv3x3 --------------------
    a1 = mish(conv(x_ref, taps_s2, C, w1_ref, b1_ref)) * mask             # (cd, hwp)
    sd = se_scale(jnp.sum(a1, axis=1, keepdims=True) * (1.0 / hw_d),
                  dw1_ref, db1_ref, dw2_ref, db2_ref)
    ys_ref[:, band:band + hwp] = a1 * sd                                   # y1*SE

    a2 = conv(ys_ref, taps_s1, cd, w2_ref, b2_ref) * mask                  # (cd, hwp)
    ys_ref[:, band:band + hwp] = a2                                        # y2

    # ---- up path: conv3x3 -> PixelShuffle -> Mish -> SE -> conv3x3 ---------
    # conv_up1 output channels are pre-permuted to parity-major order, so y3
    # already holds the 4 parity planes of the pixel-shuffled image; Mish
    # commutes with PixelShuffle; SE-up pool = plane-grouped channel sums.
    a3 = mish(conv(ys_ref, taps_s1, cd, w3_ref, b3_ref)) * mask            # (4cd, hwp)
    rs = jnp.sum(a3, axis=1, keepdims=True)                                # (4cd, 1)
    pu = (rs[0:cd] + rs[cd:2 * cd] + rs[2 * cd:3 * cd] + rs[3 * cd:4 * cd])
    su = se_scale(pu * (1.0 / hw_u), uw1_ref, ub1_ref, uw2_ref, ub2_ref)   # (cd, 1)
    for p in range(4):
        y3_ref[p * cd:(p + 1) * cd, band:band + hwp] = (
            a3[p * cd:(p + 1) * cd, :] * su)

    # conv_up2 in parity-plane form (output = 4 parity planes of the full-res
    # image); residual add fused (x arrives in the same parity-major layout).
    a4 = conv(y3_ref, taps_u2, cd, w4_ref, b4_ref)                         # (4C, hwp)
    o_ref[...] = a4 + x_ref[:, band:band + hwp]


# --------------------------------- wrapper ----------------------------------

def symmetric_forward(x, params):
    """Pallas forward of Symmetric: x is NCHW float32, returns NCHW."""
    n, c, hgt, wdt = x.shape
    assert hgt % 2 == 0 and wdt % 2 == 0, "H and W must be even"
    cd = c // 2
    assert cd % 8 == 0, "channels must be a multiple of 16 (sublane alignment)"
    ho, wo = hgt // 2, wdt // 2
    hw_d, hw_u = ho * wo, hgt * wdt
    wp = wo + 1                                 # row-padded width (zero gap col)
    hwp = _round_up(ho * wp, _LANE)
    band = _round_up(wp + 1, _LANE)             # zero side band (>= wp+1)
    slab = band + hwp + band

    taps_s2, taps_s1, taps_u2 = _taps_stride2(), _taps_stride1(), _taps_up2()

    # Input repack: 4 spatial-parity planes (plane-major channels), row-padded
    # pixels, zero side bands.  One cheap XLA layout pass; doubles as the
    # residual in exactly the kernel's output layout.
    xp = x.reshape(n, c, ho, 2, wo, 2)
    xp = jnp.transpose(xp, (0, 3, 5, 1, 2, 4)).reshape(n, 4 * c, ho, wo)
    xp = jnp.pad(xp, ((0, 0), (0, 0), (0, 0), (0, wp - wo)))
    xp = xp.reshape(n, 4 * c, ho * wp)
    xp = jnp.pad(xp, ((0, 0), (0, 0), (band, band + hwp - ho * wp)))

    idx = jnp.arange(hwp)
    mask = ((idx < ho * wp) & (idx % wp < wo)).astype(jnp.float32)[None, :]

    def as_mat(w):                              # (co,ci,3,3)->(co,9*ci) tap-major
        co, ci = w.shape[0], w.shape[1]
        return jnp.transpose(w, (0, 2, 3, 1)).reshape(co, 9 * ci)

    w1, b1 = params["conv_down1"]
    w2, b2 = params["conv_down2"]
    w3, b3 = params["conv_up1"]
    w4, b4 = params["conv_up2"]

    # conv_up1: permute output channels to parity-major (plane*cd + ci) so the
    # stored y3 is already the 4 parity planes of the pixel-shuffled image.
    perm = (jnp.arange(cd)[None, :] * 4 + jnp.arange(4)[:, None]).reshape(-1)
    w3m, b3p = as_mat(w3[perm]), b3[perm]

    # conv_up2 on parity planes: scatter the 3x3 weights into the 16 union
    # (plane, row-shift, col-shift) tap blocks, per output parity plane.
    w4pp = jnp.zeros((4, c, 16, cd), jnp.float32)
    for oy in range(2):
        for ox in range(2):
            for kd in range(3):
                for kx in range(3):
                    u = (kd + oy) * 4 + (kx + ox)
                    w4pp = w4pp.at[2 * oy + ox, :, u, :].set(w4[:, :, kd, kx])
    w4pp = w4pp.reshape(4 * c, 16 * cd)
    b4pp = jnp.tile(b4, 4)

    dw1, db1, dw2, db2 = params["se_down"]      # (cd,cs),(cs,),(cs,cd),(cd,)
    uw1, ub1, uw2, ub2 = params["se_up"]
    cs = dw1.shape[1]

    kernel = functools.partial(
        _symmetric_kernel, C=c, wp=wp, hwp=hwp, band=band, hw_d=hw_d, hw_u=hw_u,
        taps_s2=taps_s2, taps_s1=taps_s1, taps_u2=taps_u2)

    bc = lambda i: (0, 0)                       # broadcast (weight) blocks
    in_specs = [
        pl.BlockSpec((None, 4 * c, slab), lambda i: (i, 0, 0)),   # x parity slab
        pl.BlockSpec((1, hwp), bc),                               # valid mask
        pl.BlockSpec((cd, 9 * c), bc), pl.BlockSpec((cd, 1), bc),         # conv_down1
        pl.BlockSpec((cd, 9 * cd), bc), pl.BlockSpec((cd, 1), bc),        # conv_down2
        pl.BlockSpec((4 * cd, 9 * cd), bc), pl.BlockSpec((4 * cd, 1), bc),  # conv_up1
        pl.BlockSpec((4 * c, 16 * cd), bc), pl.BlockSpec((4 * c, 1), bc),   # conv_up2
        pl.BlockSpec((cd, cs), bc), pl.BlockSpec((1, cs), bc),            # SE down
        pl.BlockSpec((cd, cs), bc), pl.BlockSpec((cd, 1), bc),
        pl.BlockSpec((cd, cs), bc), pl.BlockSpec((1, cs), bc),            # SE up
        pl.BlockSpec((cd, cs), bc), pl.BlockSpec((cd, 1), bc),
    ]
    args = [
        xp, mask,
        as_mat(w1), b1.reshape(cd, 1),
        as_mat(w2), b2.reshape(cd, 1),
        w3m, b3p.reshape(4 * cd, 1),
        w4pp, b4pp.reshape(4 * c, 1),
        dw1, db1.reshape(1, cs), dw2.T, db2.reshape(cd, 1),
        uw1, ub1.reshape(1, cs), uw2.T, ub2.reshape(cd, 1),
    ]

    # TODO(synk): for large images, tile the spatial axis (grid=(N, tiles)) with
    # a one-row halo, accumulate the SE pools across tiles, and store the
    # activation slabs in bf16 on v6e/v7x; on v5e/v6e pack several batch images
    # along the lane axis of one grid step instead of relying on batch grid.
    out_pp = pl.pallas_call(
        kernel,
        out_shape=jax.ShapeDtypeStruct((n, 4 * c, hwp), jnp.float32),
        grid=(n,),
        in_specs=in_specs,
        out_specs=pl.BlockSpec((None, 4 * c, hwp), lambda i: (i, 0, 0)),
        scratch_shapes=[
            pltpu.VMEM((cd, slab), jnp.float32),          # y1 then y2 slab
            pltpu.VMEM((4 * cd, slab), jnp.float32),      # y3 (parity planes)
            pltpu.VMEM((max(9 * c, 16 * cd), hwp), jnp.float32),  # im2col taps
        ],
        compiler_params=pltpu.CompilerParams(
            dimension_semantics=("parallel",),
            vmem_limit_bytes=32 * 1024 * 1024),
    )(*args)

    # Unpack parity planes + drop gap/tail lanes (pure XLA layout pass).
    out = out_pp[:, :, :ho * wp].reshape(n, 2, 2, c, ho, wp)[..., :wo]
    out = jnp.transpose(out, (0, 3, 4, 1, 5, 2)).reshape(n, c, hgt, wdt)
    return out


# ------------------------- pure-XLA reference (check) ------------------------

def _se_scale(pooled_mean, se_params):
    w1, b1, w2, b2 = se_params
    h = jax.nn.relu(pooled_mean @ w1 + b1)
    return jax.nn.sigmoid(h @ w2 + b2)


def _reference_forward(x, params):
    def conv(v, wb, stride):
        wgt, b = wb
        y = jax.lax.conv_general_dilated(
            v, wgt, window_strides=(stride, stride), padding=((1, 1), (1, 1)),
            dimension_numbers=("NCHW", "OIHW", "NCHW"))
        return y + b[None, :, None, None]

    def mish(v):
        return v * jnp.tanh(jax.nn.softplus(v))

    def se(v, p):
        s = _se_scale(v.mean(axis=(2, 3)), p)
        return v * s[:, :, None, None]

    def pixel_shuffle(v, r):
        nn_, cc, hh, ww = v.shape
        v = v.reshape(nn_, cc // (r * r), r, r, hh, ww)
        v = jnp.transpose(v, (0, 1, 4, 2, 5, 3))
        return v.reshape(nn_, cc // (r * r), hh * r, ww * r)

    out = conv(x, params["conv_down1"], 2)
    out = se(mish(out), params["se_down"])
    out = conv(out, params["conv_down2"], 1)
    out = conv(out, params["conv_up1"], 1)
    out = se(mish(pixel_shuffle(out, 2)), params["se_up"])
    out = conv(out, params["conv_up2"], 1)
    return out + x


# ------------------------------ parameter init -------------------------------

def _kaiming_conv(key, cout, cin, scale=0.1):
    w = jax.random.normal(key, (cout, cin, 3, 3), jnp.float32)
    w = w * math.sqrt(2.0 / (cin * 9)) * scale
    return w, jnp.zeros((cout,), jnp.float32)


def _se_params(key, c, squeeze_factor=4, scale=0.1):
    cs = c // squeeze_factor
    k1, k2 = jax.random.split(key)
    w1 = jax.random.normal(k1, (c, cs), jnp.float32) * math.sqrt(2.0 / c) * scale
    w2 = jax.random.normal(k2, (cs, c), jnp.float32) * math.sqrt(2.0 / cs) * scale
    return w1, jnp.zeros((cs,), jnp.float32), w2, jnp.zeros((c,), jnp.float32)


def _make_params(key, channels, scale=0.1):
    ks = jax.random.split(key, 6)
    return {
        "conv_down1": _kaiming_conv(ks[0], channels // 2, channels, scale),
        "se_down": _se_params(ks[1], channels // 2, 4, scale),
        "conv_down2": _kaiming_conv(ks[2], channels // 2, channels // 2, scale),
        "conv_up1": _kaiming_conv(ks[3], channels * 2, channels // 2, scale),
        "se_up": _se_params(ks[4], channels // 2, 4, scale),
        "conv_up2": _kaiming_conv(ks[5], channels, channels // 2, scale),
    }


# ----------------------------------- main ------------------------------------

if __name__ == "__main__":
    channels, N, H, W = 16, 2, 16, 16

    key = jax.random.PRNGKey(0)
    kp, kx = jax.random.split(key)
    params = _make_params(kp, channels, scale=0.1)   # kaiming*0.1, as in module
    x = jax.random.normal(kx, (N, channels, H, W), jnp.float32)   # NCHW input

    fwd = jax.jit(symmetric_forward)
    out = jax.block_until_ready(fwd(x, params))

    assert out.shape == x.shape, (out.shape, x.shape)
    assert bool(jnp.all(jnp.isfinite(out)))

    # Numerical check against a pure-XLA reference of the PyTorch module.
    ref = jax.jit(_reference_forward)(x, params)
    assert bool(jnp.allclose(out, ref, rtol=1e-4, atol=1e-4)), \
        float(jnp.max(jnp.abs(out - ref)))

    # Second check with undamped weights so every layer carries O(1) signal.
    params_big = _make_params(kp, channels, scale=1.0)
    out_big = jax.block_until_ready(fwd(x, params_big))
    ref_big = jax.jit(_reference_forward)(x, params_big)
    assert bool(jnp.allclose(out_big, ref_big, rtol=5e-2, atol=5e-2)), \
        float(jnp.max(jnp.abs(out_big - ref_big)))

    print("KERNEL_OK")
</pallas_src>

<mosaic_0001>
module attributes {stable_mosaic.version = 11 : i64} {
  func.func @_symmetric_kernel(%arg0: i32, %arg1: memref<1x64x384xf32, #tpu.memory_space<vmem>>, %arg2: memref<1x128xf32, #tpu.memory_space<vmem>>, %arg3: memref<8x144xf32, #tpu.memory_space<vmem>>, %arg4: memref<8x1xf32, #tpu.memory_space<vmem>>, %arg5: memref<8x72xf32, #tpu.memory_space<vmem>>, %arg6: memref<8x1xf32, #tpu.memory_space<vmem>>, %arg7: memref<32x72xf32, #tpu.memory_space<vmem>>, %arg8: memref<32x1xf32, #tpu.memory_space<vmem>>, %arg9: memref<64x128xf32, #tpu.memory_space<vmem>>, %arg10: memref<64x1xf32, #tpu.memory_space<vmem>>, %arg11: memref<8x2xf32, #tpu.memory_space<vmem>>, %arg12: memref<1x2xf32, #tpu.memory_space<vmem>>, %arg13: memref<8x2xf32, #tpu.memory_space<vmem>>, %arg14: memref<8x1xf32, #tpu.memory_space<vmem>>, %arg15: memref<8x2xf32, #tpu.memory_space<vmem>>, %arg16: memref<1x2xf32, #tpu.memory_space<vmem>>, %arg17: memref<8x2xf32, #tpu.memory_space<vmem>>, %arg18: memref<8x1xf32, #tpu.memory_space<vmem>>, %arg19: memref<1x64x128xf32, #tpu.memory_space<vmem>>, %arg20: memref<8x384xf32, #tpu.memory_space<vmem>>, %arg21: memref<32x384xf32, #tpu.memory_space<vmem>>, %arg22: memref<144x128xf32, #tpu.memory_space<vmem>>) attributes {dimension_semantics = [#tpu.dimension_semantics<parallel>], iteration_bounds = array<i64: 2>, scalar_prefetch = 0 : i64, scratch_operands = 3 : i64, tpu.core_type = #tpu.core_type<tc>, window_params = [{transform_indices = @transform_0, window_bounds = array<i64: 1, 64, 384>}, {pipeline_mode = #tpu.pipeline_mode<synchronous>, transform_indices = @transform_1, window_bounds = array<i64: 1, 128>}, {pipeline_mode = #tpu.pipeline_mode<synchronous>, transform_indices = @transform_2, window_bounds = array<i64: 8, 144>}, {pipeline_mode = #tpu.pipeline_mode<synchronous>, transform_indices = @transform_3, window_bounds = array<i64: 8, 1>}, {pipeline_mode = #tpu.pipeline_mode<synchronous>, transform_indices = @transform_4, window_bounds = array<i64: 8, 72>}, {pipeline_mode = #tpu.pipeline_mode<synchronous>, transform_indices = @transform_5, window_bounds = array<i64: 8, 1>}, {pipeline_mode = #tpu.pipeline_mode<synchronous>, transform_indices = @transform_6, window_bounds = array<i64: 32, 72>}, {pipeline_mode = #tpu.pipeline_mode<synchronous>, transform_indices = @transform_7, window_bounds = array<i64: 32, 1>}, {pipeline_mode = #tpu.pipeline_mode<synchronous>, transform_indices = @transform_8, window_bounds = array<i64: 64, 128>}, {pipeline_mode = #tpu.pipeline_mode<synchronous>, transform_indices = @transform_9, window_bounds = array<i64: 64, 1>}, {pipeline_mode = #tpu.pipeline_mode<synchronous>, transform_indices = @transform_10, window_bounds = array<i64: 8, 2>}, {pipeline_mode = #tpu.pipeline_mode<synchronous>, transform_indices = @transform_11, window_bounds = array<i64: 1, 2>}, {pipeline_mode = #tpu.pipeline_mode<synchronous>, transform_indices = @transform_12, window_bounds = array<i64: 8, 2>}, {pipeline_mode = #tpu.pipeline_mode<synchronous>, transform_indices = @transform_13, window_bounds = array<i64: 8, 1>}, {pipeline_mode = #tpu.pipeline_mode<synchronous>, transform_indices = @transform_14, window_bounds = array<i64: 8, 2>}, {pipeline_mode = #tpu.pipeline_mode<synchronous>, transform_indices = @transform_15, window_bounds = array<i64: 1, 2>}, {pipeline_mode = #tpu.pipeline_mode<synchronous>, transform_indices = @transform_16, window_bounds = array<i64: 8, 2>}, {pipeline_mode = #tpu.pipeline_mode<synchronous>, transform_indices = @transform_17, window_bounds = array<i64: 8, 1>}, {transform_indices = @transform_18, window_bounds = array<i64: 1, 64, 128>}]} {
    %c0 = arith.constant 0 : index
    %c0_0 = arith.constant 0 : index
    %0 = vector.load %arg2[%c0, %c0_0] : memref<1x128xf32, #tpu.memory_space<vmem>>, vector<1x128xf32>
    %cst = arith.constant 0.000000e+00 : f32
    %1 = vector.broadcast %cst : f32 to vector<8x128xf32>
    %c0_1 = arith.constant 0 : index
    %c0_2 = arith.constant 0 : index
    %2 = vector.load %arg20[%c0_1, %c0_2] : memref<8x384xf32, #tpu.memory_space<vmem>>, vector<8x128xf32>
    tpu.vector_store %arg20[%c0_1, %c0_2], %1 {strides = array<i32>} : memref<8x384xf32, #tpu.memory_space<vmem>>, vector<8x128xf32>,
    %cst_3 = arith.constant 0.000000e+00 : f32
    %3 = vector.broadcast %cst_3 : f32 to vector<8x128xf32>
    %c0_4 = arith.constant 0 : index
    %c256 = arith.constant 256 : index
    %4 = vector.load %arg20[%c0_4, %c256] : memref<8x384xf32, #tpu.memory_space<vmem>>, vector<8x128xf32>
    tpu.vector_store %arg20[%c0_4, %c256], %3 {strides = array<i32>} : memref<8x384xf32, #tpu.memory_space<vmem>>, vector<8x128xf32>,
    %cst_5 = arith.constant 0.000000e+00 : f32
    %5 = vector.broadcast %cst_5 : f32 to vector<32x128xf32>
    %c0_6 = arith.constant 0 : index
    %c0_7 = arith.constant 0 : index
    %6 = vector.load %arg21[%c0_6, %c0_7] : memref<32x384xf32, #tpu.memory_space<vmem>>, vector<32x128xf32>
    tpu.vector_store %arg21[%c0_6, %c0_7], %5 {strides = array<i32>} : memref<32x384xf32, #tpu.memory_space<vmem>>, vector<32x128xf32>,
    %cst_8 = arith.constant 0.000000e+00 : f32
    %7 = vector.broadcast %cst_8 : f32 to vector<32x128xf32>
    %c0_9 = arith.constant 0 : index
    %c256_10 = arith.constant 256 : index
    %8 = vector.load %arg21[%c0_9, %c256_10] : memref<32x384xf32, #tpu.memory_space<vmem>>, vector<32x128xf32>
    tpu.vector_store %arg21[%c0_9, %c256_10], %7 {strides = array<i32>} : memref<32x384xf32, #tpu.memory_space<vmem>>, vector<32x128xf32>,
    %c0_11 = arith.constant 0 : index
    %c48 = arith.constant 48 : index
    %c118 = arith.constant 118 : index
    %9 = vector.load %arg1[%c0_11, %c48, %c118] : memref<1x64x384xf32, #tpu.memory_space<vmem>>, vector<1x16x128xf32>
    %10 = vector.shape_cast %9 : vector<1x16x128xf32> to vector<16x128xf32>
    %c0_12 = arith.constant 0 : index
    %c0_13 = arith.constant 0 : index
    %11 = vector.load %arg22[%c0_12, %c0_13] : memref<144x128xf32, #tpu.memory_space<vmem>>, vector<16x128xf32>
    tpu.vector_store %arg22[%c0_12, %c0_13], %10 {strides = array<i32>} : memref<144x128xf32, #tpu.memory_space<vmem>>, vector<16x128xf32>,
    %c0_14 = arith.constant 0 : index
    %c32 = arith.constant 32 : index
    %c119 = arith.constant 119 : index
    %12 = vector.load %arg1[%c0_14, %c32, %c119] : memref<1x64x384xf32, #tpu.memory_space<vmem>>, vector<1x16x128xf32>
    %13 = vector.shape_cast %12 : vector<1x16x128xf32> to vector<16x128xf32>
    %c16 = arith.constant 16 : index
    %c0_15 = arith.constant 0 : index
    %14 = vector.load %arg22[%c16, %c0_15] : memref<144x128xf32, #tpu.memory_space<vmem>>, vector<16x128xf32>
    tpu.vector_store %arg22[%c16, %c0_15], %13 {strides = array<i32>} : memref<144x128xf32, #tpu.memory_space<vmem>>, vector<16x128xf32>,
    %c0_16 = arith.constant 0 : index
    %c48_17 = arith.constant 48 : index
    %c119_18 = arith.constant 119 : index
    %15 = vector.load %arg1[%c0_16, %c48_17, %c119_18] : memref<1x64x384xf32, #tpu.memory_space<vmem>>, vector<1x16x128xf32>
    %16 = vector.shape_cast %15 : vector<1x16x128xf32> to vector<16x128xf32>
    %c32_19 = arith.constant 32 : index
    %c0_20 = arith.constant 0 : index
    %17 = vector.load %arg22[%c32_19, %c0_20] : memref<144x128xf32, #tpu.memory_space<vmem>>, vector<16x128xf32>
    tpu.vector_store %arg22[%c32_19, %c0_20], %16 {strides = array<i32>} : memref<144x128xf32, #tpu.memory_space<vmem>>, vector<16x128xf32>,
    %c0_21 = arith.constant 0 : index
    %c16_22 = arith.constant 16 : index
    %c127 = arith.constant 127 : index
    %18 = vector.load %arg1[%c0_21, %c16_22, %c127] : memref<1x64x384xf32, #tpu.memory_space<vmem>>, vector<1x16x128xf32>
    %19 = vector.shape_cast %18 : vector<1x16x128xf32> to vector<16x128xf32>
    %c48_23 = arith.constant 48 : index
    %c0_24 = arith.constant 0 : index
    %20 = vector.load %arg22[%c48_23, %c0_24] : memref<144x128xf32, #tpu.memory_space<vmem>>, vector<16x128xf32>
    tpu.vector_store %arg22[%c48_23, %c0_24], %19 {strides = array<i32>} : memref<144x128xf32, #tpu.memory_space<vmem>>, vector<16x128xf32>,
    %c0_25 = arith.constant 0 : index
    %c0_26 = arith.constant 0 : index
    %c128 = arith.constant 128 : index
    %21 = vector.load %arg1[%c0_25, %c0_26, %c128] : memref<1x64x384xf32, #tpu.memory_space<vmem>>, vector<1x16x128xf32>
    %22 = vector.shape_cast %21 : vector<1x16x128xf32> to vector<16x128xf32>
    %c64 = arith.constant 64 : index
    %c0_27 = arith.constant 0 : index
    %23 = vector.load %arg22[%c64, %c0_27] : memref<144x128xf32, #tpu.memory_space<vmem>>, vector<16x128xf32>
    tpu.vector_store %arg22[%c64, %c0_27], %22 {strides = array<i32>} : memref<144x128xf32, #tpu.memory_space<vmem>>, vector<16x128xf32>,
    %c0_28 = arith.constant 0 : index
    %c16_29 = arith.constant 16 : index
    %c128_30 = arith.constant 128 : index
    %24 = vector.load %arg1[%c0_28, %c16_29, %c128_30] : memref<1x64x384xf32, #tpu.memory_space<vmem>>, vector<1x16x128xf32>
    %25 = vector.shape_cast %24 : vector<1x16x128xf32> to vector<16x128xf32>
    %c80 = arith.constant 80 : index
    %c0_31 = arith.constant 0 : index
    %26 = vector.load %arg22[%c80, %c0_31] : memref<144x128xf32, #tpu.memory_space<vmem>>, vector<16x128xf32>
    tpu.vector_store %arg22[%c80, %c0_31], %25 {strides = array<i32>} : memref<144x128xf32, #tpu.memory_space<vmem>>, vector<16x128xf32>,
    %c0_32 = arith.constant 0 : index
    %c48_33 = arith.constant 48 : index
    %c127_34 = arith.constant 127 : index
    %27 = vector.load %arg1[%c0_32, %c48_33, %c127_34] : memref<1x64x384xf32, #tpu.memory_space<vmem>>, vector<1x16x128xf32>
    %28 = vector.shape_cast %27 : vector<1x16x128xf32> to vector<16x128xf32>
    %c96 = arith.constant 96 : index
    %c0_35 = arith.constant 0 : index
    %29 = vector.load %arg22[%c96, %c0_35] : memref<144x128xf32, #tpu.memory_space<vmem>>, vector<16x128xf32>
    tpu.vector_store %arg22[%c96, %c0_35], %28 {strides = array<i32>} : memref<144x128xf32, #tpu.memory_space<vmem>>, vector<16x128xf32>,
    %c0_36 = arith.constant 0 : index
    %c32_37 = arith.constant 32 : index
    %c128_38 = arith.constant 128 : index
    %30 = vector.load %arg1[%c0_36, %c32_37, %c128_38] : memref<1x64x384xf32, #tpu.memory_space<vmem>>, vector<1x16x128xf32>
    %31 = vector.shape_cast %30 : vector<1x16x128xf32> to vector<16x128xf32>
    %c112 = arith.constant 112 : index
    %c0_39 = arith.constant 0 : index
    %32 = vector.load %arg22[%c112, %c0_39] : memref<144x128xf32, #tpu.memory_space<vmem>>, vector<16x128xf32>
    tpu.vector_store %arg22[%c112, %c0_39], %31 {strides = array<i32>} : memref<144x128xf32, #tpu.memory_space<vmem>>, vector<16x128xf32>,
    %c0_40 = arith.constant 0 : index
    %c48_41 = arith.constant 48 : index
    %c128_42 = arith.constant 128 : index
    %33 = vector.load %arg1[%c0_40, %c48_41, %c128_42] : memref<1x64x384xf32, #tpu.memory_space<vmem>>, vector<1x16x128xf32>
    %34 = vector.shape_cast %33 : vector<1x16x128xf32> to vector<16x128xf32>
    %c128_43 = arith.constant 128 : index
    %c0_44 = arith.constant 0 : index
    %35 = vector.load %arg22[%c128_43, %c0_44] : memref<144x128xf32, #tpu.memory_space<vmem>>, vector<16x128xf32>
    tpu.vector_store %arg22[%c128_43, %c0_44], %34 {strides = array<i32>} : memref<144x128xf32, #tpu.memory_space<vmem>>, vector<16x128xf32>,
    %c0_45 = arith.constant 0 : index
    %c0_46 = arith.constant 0 : index
    %36 = vector.load %arg3[%c0_45, %c0_46] : memref<8x144xf32, #tpu.memory_space<vmem>>, vector<8x144xf32>
    %c0_47 = arith.constant 0 : index
    %c0_48 = arith.constant 0 : index
    %37 = vector.load %arg22[%c0_47, %c0_48] : memref<144x128xf32, #tpu.memory_space<vmem>>, vector<144x128xf32>
    %cst_49 = arith.constant dense<0.000000e+00> : vector<8x128xf32>
    %38 = tpu.matmul %36, %37, %cst_49 {dimension_numbers = #tpu.dot_dimension_numbers<[1], [0], [0], [1], [0, 0, 1, 1], [], []>} : vector<8x144xf32>, vector<144x128xf32>, vector<8x128xf32> -> vector<8x128xf32>
    %c0_50 = arith.constant 0 : index
    %c0_51 = arith.constant 0 : index
    %39 = vector.load %arg4[%c0_50, %c0_51] : memref<8x1xf32, #tpu.memory_space<vmem>>, vector<8x1xf32>
    %40 = vector.broadcast %39 : vector<8x1xf32> to vector<8x128xf32>
    %41 = arith.addf %38, %40 : vector<8x128xf32>
    %cst_52 = arith.constant 2.000000e+01 : f32
    %42 = vector.broadcast %cst_52 : f32 to vector<8x128xf32>
    %43 = arith.minimumf %41, %42 : vector<8x128xf32>
    %44 = math.exp %43 : vector<8x128xf32>
    %cst_53 = arith.constant 2.000000e+00 : f32
    %45 = vector.broadcast %cst_53 : f32 to vector<8x128xf32>
    %46 = arith.addf %44, %45 : vector<8x128xf32>
    %47 = arith.mulf %44, %46 : vector<8x128xf32>
    %48 = arith.mulf %41, %47 : vector<8x128xf32>
    %cst_54 = arith.constant 2.000000e+00 : f32
    %49 = vector.broadcast %cst_54 : f32 to vector<8x128xf32>
    %50 = arith.addf %47, %49 : vector<8x128xf32>
    %51 = tpu.reciprocal %50 : vector<8x128xf32> -> vector<8x128xf32>
    %52 = arith.mulf %48, %51 : vector<8x128xf32>
    %53 = vector.broadcast %0 : vector<1x128xf32> to vector<8x128xf32>
    %54 = arith.mulf %52, %53 : vector<8x128xf32>
    %cst_55 = arith.constant dense<0.000000e+00> : vector<8xf32>
    %55 = vector.multi_reduction <add>, %54, %cst_55 [1] : vector<8x128xf32> to vector<8xf32>
    %56 = vector.shape_cast %55 : vector<8xf32> to vector<8x1xf32>
    %cst_56 = arith.constant 1.562500e-02 : f32
    %57 = vector.broadcast %cst_56 : f32 to vector<8x1xf32>
    %58 = arith.mulf %56, %57 : vector<8x1xf32>
    %c0_57 = arith.constant 0 : index
    %c0_58 = arith.constant 0 : index
    %59 = vector.load %arg11[%c0_57, %c0_58] : memref<8x2xf32, #tpu.memory_space<vmem>>, vector<8x2xf32>
    %60 = vector.broadcast %58 : vector<8x1xf32> to vector<8x2xf32>
    %61 = arith.mulf %59, %60 : vector<8x2xf32>
    %cst_59 = arith.constant dense<0.000000e+00> : vector<2xf32>
    %62 = vector.multi_reduction <add>, %61, %cst_59 [0] : vector<8x2xf32> to vector<2xf32>
    %63 = vector.shape_cast %62 : vector<2xf32> to vector<1x2xf32>
    %c0_60 = arith.constant 0 : index
    %c0_61 = arith.constant 0 : index
    %64 = vector.load %arg12[%c0_60, %c0_61] : memref<1x2xf32, #tpu.memory_space<vmem>>, vector<1x2xf32>
    %65 = arith.addf %63, %64 : vector<1x2xf32>
    %cst_62 = arith.constant 0.000000e+00 : f32
    %66 = vector.broadcast %cst_62 : f32 to vector<1x2xf32>
    %67 = arith.maximumf %65, %66 : vector<1x2xf32>
    %c0_63 = arith.constant 0 : index
    %c0_64 = arith.constant 0 : index
    %68 = vector.load %arg13[%c0_63, %c0_64] : memref<8x2xf32, #tpu.memory_space<vmem>>, vector<8x2xf32>
    %69 = vector.broadcast %67 : vector<1x2xf32> to vector<8x2xf32>
    %70 = arith.mulf %68, %69 : vector<8x2xf32>
    %cst_65 = arith.constant dense<0.000000e+00> : vector<8xf32>
    %71 = vector.multi_reduction <add>, %70, %cst_65 [1] : vector<8x2xf32> to vector<8xf32>
    %72 = vector.shape_cast %71 : vector<8xf32> to vector<8x1xf32>
    %c0_66 = arith.constant 0 : index
    %c0_67 = arith.constant 0 : index
    %73 = vector.load %arg14[%c0_66, %c0_67] : memref<8x1xf32, #tpu.memory_space<vmem>>, vector<8x1xf32>
    %74 = arith.addf %72, %73 : vector<8x1xf32>
    %75 = arith.negf %74 : vector<8x1xf32>
    %76 = math.exp %75 : vector<8x1xf32>
    %cst_68 = arith.constant 1.000000e+00 : f32
    %77 = vector.broadcast %cst_68 : f32 to vector<8x1xf32>
    %78 = arith.addf %77, %76 : vector<8x1xf32>
    %79 = arith.divf %77, %78 : vector<8x1xf32>
    %80 = vector.broadcast %79 : vector<8x1xf32> to vector<8x128xf32>
    %81 = arith.mulf %54, %80 : vector<8x128xf32>
    %c0_69 = arith.constant 0 : index
    %c128_70 = arith.constant 128 : index
    %82 = vector.load %arg20[%c0_69, %c128_70] : memref<8x384xf32, #tpu.memory_space<vmem>>, vector<8x128xf32>
    tpu.vector_store %arg20[%c0_69, %c128_70], %81 {strides = array<i32>} : memref<8x384xf32, #tpu.memory_space<vmem>>, vector<8x128xf32>,
    %c0_71 = arith.constant 0 : index
    %c118_72 = arith.constant 118 : index
    %83 = vector.load %arg20[%c0_71, %c118_72] : memref<8x384xf32, #tpu.memory_space<vmem>>, vector<8x128xf32>
    %c0_73 = arith.constant 0 : index
    %c0_74 = arith.constant 0 : index
    %84 = vector.load %arg22[%c0_73, %c0_74] : memref<144x128xf32, #tpu.memory_space<vmem>>, vector<8x128xf32>
    tpu.vector_store %arg22[%c0_73, %c0_74], %83 {strides = array<i32>} : memref<144x128xf32, #tpu.memory_space<vmem>>, vector<8x128xf32>,
    %c0_75 = arith.constant 0 : index
    %c119_76 = arith.constant 119 : index
    %85 = vector.load %arg20[%c0_75, %c119_76] : memref<8x384xf32, #tpu.memory_space<vmem>>, vector<8x128xf32>
    %c8 = arith.constant 8 : index
    %c0_77 = arith.constant 0 : index
    %86 = vector.load %arg22[%c8, %c0_77] : memref<144x128xf32, #tpu.memory_space<vmem>>, vector<8x128xf32>
    tpu.vector_store %arg22[%c8, %c0_77], %85 {strides = array<i32>} : memref<144x128xf32, #tpu.memory_space<vmem>>, vector<8x128xf32>,
    %c0_78 = arith.constant 0 : index
    %c120 = arith.constant 120 : index
    %87 = vector.load %arg20[%c0_78, %c120] : memref<8x384xf32, #tpu.memory_space<vmem>>, vector<8x128xf32>
    %c16_79 = arith.constant 16 : index
    %c0_80 = arith.constant 0 : index
    %88 = vector.load %arg22[%c16_79, %c0_80] : memref<144x128xf32, #tpu.memory_space<vmem>>, vector<8x128xf32>
    tpu.vector_store %arg22[%c16_79, %c0_80], %87 {strides = array<i32>} : memref<144x128xf32, #tpu.memory_space<vmem>>, vector<8x128xf32>,
    %c0_81 = arith.constant 0 : index
    %c127_82 = arith.constant 127 : index
    %89 = vector.load %arg20[%c0_81, %c127_82] : memref<8x384xf32, #tpu.memory_space<vmem>>, vector<8x128xf32>
    %c24 = arith.constant 24 : index
    %c0_83 = arith.constant 0 : index
    %90 = vector.load %arg22[%c24, %c0_83] : memref<144x128xf32, #tpu.memory_space<vmem>>, vector<8x128xf32>
    tpu.vector_store %arg22[%c24, %c0_83], %89 {strides = array<i32>} : memref<144x128xf32, #tpu.memory_space<vmem>>, vector<8x128xf32>,
    %c0_84 = arith.constant 0 : index
    %c128_85 = arith.constant 128 : index
    %91 = vector.load %arg20[%c0_84, %c128_85] : memref<8x384xf32, #tpu.memory_space<vmem>>, vector<8x128xf32>
    %c32_86 = arith.constant 32 : index
    %c0_87 = arith.constant 0 : index
    %92 = vector.load %arg22[%c32_86, %c0_87] : memref<144x128xf32, #tpu.memory_space<vmem>>, vector<8x128xf32>
    tpu.vector_store %arg22[%c32_86, %c0_87], %91 {strides = array<i32>} : memref<144x128xf32, #tpu.memory_space<vmem>>, vector<8x128xf32>,
    %c0_88 = arith.constant 0 : index
    %c129 = arith.constant 129 : index
    %93 = vector.load %arg20[%c0_88, %c129] : memref<8x384xf32, #tpu.memory_space<vmem>>, vector<8x128xf32>
    %c40 = arith.constant 40 : index
    %c0_89 = arith.constant 0 : index
    %94 = vector.load %arg22[%c40, %c0_89] : memref<144x128xf32, #tpu.memory_space<vmem>>, vector<8x128xf32>
    tpu.vector_store %arg22[%c40, %c0_89], %93 {strides = array<i32>} : memref<144x128xf32, #tpu.memory_space<vmem>>, vector<8x128xf32>,
    %c0_90 = arith.constant 0 : index
    %c136 = arith.constant 136 : index
    %95 = vector.load %arg20[%c0_90, %c136] : memref<8x384xf32, #tpu.memory_space<vmem>>, vector<8x128xf32>
    %c48_91 = arith.constant 48 : index
    %c0_92 = arith.constant 0 : index
    %96 = vector.load %arg22[%c48_91, %c0_92] : memref<144x128xf32, #tpu.memory_space<vmem>>, vector<8x128xf32>
    tpu.vector_store %arg22[%c48_91, %c0_92], %95 {strides = array<i32>} : memref<144x128xf32, #tpu.memory_space<vmem>>, vector<8x128xf32>,
    %c0_93 = arith.constant 0 : index
    %c137 = arith.constant 137 : index
    %97 = vector.load %arg20[%c0_93, %c137] : memref<8x384xf32, #tpu.memory_space<vmem>>, vector<8x128xf32>
    %c56 = arith.constant 56 : index
    %c0_94 = arith.constant 0 : index
    %98 = vector.load %arg22[%c56, %c0_94] : memref<144x128xf32, #tpu.memory_space<vmem>>, vector<8x128xf32>
    tpu.vector_store %arg22[%c56, %c0_94], %97 {strides = array<i32>} : memref<144x128xf32, #tpu.memory_space<vmem>>, vector<8x128xf32>,
    %c0_95 = arith.constant 0 : index
    %c138 = arith.constant 138 : index
    %99 = vector.load %arg20[%c0_95, %c138] : memref<8x384xf32, #tpu.memory_space<vmem>>, vector<8x128xf32>
    %c64_96 = arith.constant 64 : index
    %c0_97 = arith.constant 0 : index
    %100 = vector.load %arg22[%c64_96, %c0_97] : memref<144x128xf32, #tpu.memory_space<vmem>>, vector<8x128xf32>
    tpu.vector_store %arg22[%c64_96, %c0_97], %99 {strides = array<i32>} : memref<144x128xf32, #tpu.memory_space<vmem>>, vector<8x128xf32>,
    %c0_98 = arith.constant 0 : index
    %c0_99 = arith.constant 0 : index
    %101 = vector.load %arg5[%c0_98, %c0_99] : memref<8x72xf32, #tpu.memory_space<vmem>>, vector<8x72xf32>
    %c0_100 = arith.constant 0 : index
    %c0_101 = arith.constant 0 : index
    %102 = vector.load %arg22[%c0_100, %c0_101] : memref<144x128xf32, #tpu.memory_space<vmem>>, vector<72x128xf32>
    %cst_102 = arith.constant dense<0.000000e+00> : vector<8x128xf32>
    %103 = tpu.matmul %101, %102, %cst_102 {dimension_numbers = #tpu.dot_dimension_numbers<[1], [0], [0], [1], [0, 0, 1, 1], [], []>} : vector<8x72xf32>, vector<72x128xf32>, vector<8x128xf32> -> vector<8x128xf32>
    %c0_103 = arith.constant 0 : index
    %c0_104 = arith.constant 0 : index
    %104 = vector.load %arg6[%c0_103, %c0_104] : memref<8x1xf32, #tpu.memory_space<vmem>>, vector<8x1xf32>
    %105 = vector.broadcast %104 : vector<8x1xf32> to vector<8x128xf32>
    %106 = arith.addf %103, %105 : vector<8x128xf32>
    %107 = vector.broadcast %0 : vector<1x128xf32> to vector<8x128xf32>
    %108 = arith.mulf %106, %107 : vector<8x128xf32>
    %c0_105 = arith.constant 0 : index
    %c128_106 = arith.constant 128 : index
    %109 = vector.load %arg20[%c0_105, %c128_106] : memref<8x384xf32, #tpu.memory_space<vmem>>, vector<8x128xf32>
    tpu.vector_store %arg20[%c0_105, %c128_106], %108 {strides = array<i32>} : memref<8x384xf32, #tpu.memory_space<vmem>>, vector<8x128xf32>,
    %c0_107 = arith.constant 0 : index
    %c118_108 = arith.constant 118 : index
    %110 = vector.load %arg20[%c0_107, %c118_108] : memref<8x384xf32, #tpu.memory_space<vmem>>, vector<8x128xf32>
    %c0_109 = arith.constant 0 : index
    %c0_110 = arith.constant 0 : index
    %111 = vector.load %arg22[%c0_109, %c0_110] : memref<144x128xf32, #tpu.memory_space<vmem>>, vector<8x128xf32>
    tpu.vector_store %arg22[%c0_109, %c0_110], %110 {strides = array<i32>} : memref<144x128xf32, #tpu.memory_space<vmem>>, vector<8x128xf32>,
    %c0_111 = arith.constant 0 : index
    %c119_112 = arith.constant 119 : index
    %112 = vector.load %arg20[%c0_111, %c119_112] : memref<8x384xf32, #tpu.memory_space<vmem>>, vector<8x128xf32>
    %c8_113 = arith.constant 8 : index
    %c0_114 = arith.constant 0 : index
    %113 = vector.load %arg22[%c8_113, %c0_114] : memref<144x128xf32, #tpu.memory_space<vmem>>, vector<8x128xf32>
    tpu.vector_store %arg22[%c8_113, %c0_114], %112 {strides = array<i32>} : memref<144x128xf32, #tpu.memory_space<vmem>>, vector<8x128xf32>,
    %c0_115 = arith.constant 0 : index
    %c120_116 = arith.constant 120 : index
    %114 = vector.load %arg20[%c0_115, %c120_116] : memref<8x384xf32, #tpu.memory_space<vmem>>, vector<8x128xf32>
    %c16_117 = arith.constant 16 : index
    %c0_118 = arith.constant 0 : index
    %115 = vector.load %arg22[%c16_117, %c0_118] : memref<144x128xf32, #tpu.memory_space<vmem>>, vector<8x128xf32>
    tpu.vector_store %arg22[%c16_117, %c0_118], %114 {strides = array<i32>} : memref<144x128xf32, #tpu.memory_space<vmem>>, vector<8x128xf32>,
    %c0_119 = arith.constant 0 : index
    %c127_120 = arith.constant 127 : index
    %116 = vector.load %arg20[%c0_119, %c127_120] : memref<8x384xf32, #tpu.memory_space<vmem>>, vector<8x128xf32>
    %c24_121 = arith.constant 24 : index
    %c0_122 = arith.constant 0 : index
    %117 = vector.load %arg22[%c24_121, %c0_122] : memref<144x128xf32, #tpu.memory_space<vmem>>, vector<8x128xf32>
    tpu.vector_store %arg22[%c24_121, %c0_122], %116 {strides = array<i32>} : memref<144x128xf32, #tpu.memory_space<vmem>>, vector<8x128xf32>,
    %c0_123 = arith.constant 0 : index
    %c128_124 = arith.constant 128 : index
    %118 = vector.load %arg20[%c0_123, %c128_124] : memref<8x384xf32, #tpu.memory_space<vmem>>, vector<8x128xf32>
    %c32_125 = arith.constant 32 : index
    %c0_126 = arith.constant 0 : index
    %119 = vector.load %arg22[%c32_125, %c0_126] : memref<144x128xf32, #tpu.memory_space<vmem>>, vector<8x128xf32>
    tpu.vector_store %arg22[%c32_125, %c0_126], %118 {strides = array<i32>} : memref<144x128xf32, #tpu.memory_space<vmem>>, vector<8x128xf32>,
    %c0_127 = arith.constant 0 : index
    %c129_128 = arith.constant 129 : index
    %120 = vector.load %arg20[%c0_127, %c129_128] : memref<8x384xf32, #tpu.memory_space<vmem>>, vector<8x128xf32>
    %c40_129 = arith.constant 40 : index
    %c0_130 = arith.constant 0 : index
    %121 = vector.load %arg22[%c40_129, %c0_130] : memref<144x128xf32, #tpu.memory_space<vmem>>, vector<8x128xf32>
    tpu.vector_store %arg22[%c40_129, %c0_130], %120 {strides = array<i32>} : memref<144x128xf32, #tpu.memory_space<vmem>>, vector<8x128xf32>,
    %c0_131 = arith.constant 0 : index
    %c136_132 = arith.constant 136 : index
    %122 = vector.load %arg20[%c0_131, %c136_132] : memref<8x384xf32, #tpu.memory_space<vmem>>, vector<8x128xf32>
    %c48_133 = arith.constant 48 : index
    %c0_134 = arith.constant 0 : index
    %123 = vector.load %arg22[%c48_133, %c0_134] : memref<144x128xf32, #tpu.memory_space<vmem>>, vector<8x128xf32>
    tpu.vector_store %arg22[%c48_133, %c0_134], %122 {strides = array<i32>} : memref<144x128xf32, #tpu.memory_space<vmem>>, vector<8x128xf32>,
    %c0_135 = arith.constant 0 : index
    %c137_136 = arith.constant 137 : index
    %124 = vector.load %arg20[%c0_135, %c137_136] : memref<8x384xf32, #tpu.memory_space<vmem>>, vector<8x128xf32>
    %c56_137 = arith.constant 56 : index
    %c0_138 = arith.constant 0 : index
    %125 = vector.load %arg22[%c56_137, %c0_138] : memref<144x128xf32, #tpu.memory_space<vmem>>, vector<8x128xf32>
    tpu.vector_store %arg22[%c56_137, %c0_138], %124 {strides = array<i32>} : memref<144x128xf32, #tpu.memory_space<vmem>>, vector<8x128xf32>,
    %c0_139 = arith.constant 0 : index
    %c138_140 = arith.constant 138 : index
    %126 = vector.load %arg20[%c0_139, %c138_140] : memref<8x384xf32, #tpu.memory_space<vmem>>, vector<8x128xf32>
    %c64_141 = arith.constant 64 : index
    %c0_142 = arith.constant 0 : index
    %127 = vector.load %arg22[%c64_141, %c0_142] : memref<144x128xf32, #tpu.memory_space<vmem>>, vector<8x128xf32>
    tpu.vector_store %arg22[%c64_141, %c0_142], %126 {strides = array<i32>} : memref<144x128xf32, #tpu.memory_space<vmem>>, vector<8x128xf32>,
    %c0_143 = arith.constant 0 : index
    %c0_144 = arith.constant 0 : index
    %128 = vector.load %arg7[%c0_143, %c0_144] : memref<32x72xf32, #tpu.memory_space<vmem>>, vector<32x72xf32>
    %c0_145 = arith.constant 0 : index
    %c0_146 = arith.constant 0 : index
    %129 = vector.load %arg22[%c0_145, %c0_146] : memref<144x128xf32, #tpu.memory_space<vmem>>, vector<72x128xf32>
    %cst_147 = arith.constant dense<0.000000e+00> : vector<32x128xf32>
    %130 = tpu.matmul %128, %129, %cst_147 {dimension_numbers = #tpu.dot_dimension_numbers<[1], [0], [0], [1], [0, 0, 1, 1], [], []>} : vector<32x72xf32>, vector<72x128xf32>, vector<32x128xf32> -> vector<32x128xf32>
    %c0_148 = arith.constant 0 : index
    %c0_149 = arith.constant 0 : index
    %131 = vector.load %arg8[%c0_148, %c0_149] : memref<32x1xf32, #tpu.memory_space<vmem>>, vector<32x1xf32>
    %132 = vector.broadcast %131 : vector<32x1xf32> to vector<32x128xf32>
    %133 = arith.addf %130, %132 : vector<32x128xf32>
    %cst_150 = arith.constant 2.000000e+01 : f32
    %134 = vector.broadcast %cst_150 : f32 to vector<32x128xf32>
    %135 = arith.minimumf %133, %134 : vector<32x128xf32>
    %136 = math.exp %135 : vector<32x128xf32>
    %cst_151 = arith.constant 2.000000e+00 : f32
    %137 = vector.broadcast %cst_151 : f32 to vector<32x128xf32>
    %138 = arith.addf %136, %137 : vector<32x128xf32>
    %139 = arith.mulf %136, %138 : vector<32x128xf32>
    %140 = arith.mulf %133, %139 : vector<32x128xf32>
    %cst_152 = arith.constant 2.000000e+00 : f32
    %141 = vector.broadcast %cst_152 : f32 to vector<32x128xf32>
    %142 = arith.addf %139, %141 : vector<32x128xf32>
    %143 = tpu.reciprocal %142 : vector<32x128xf32> -> vector<32x128xf32>
    %144 = arith.mulf %140, %143 : vector<32x128xf32>
    %145 = vector.broadcast %0 : vector<1x128xf32> to vector<32x128xf32>
    %146 = arith.mulf %144, %145 : vector<32x128xf32>
    %cst_153 = arith.constant dense<0.000000e+00> : vector<32xf32>
    %147 = vector.multi_reduction <add>, %146, %cst_153 [1] : vector<32x128xf32> to vector<32xf32>
    %148 = vector.shape_cast %147 : vector<32xf32> to vector<32x1xf32>
    %149 = vector.extract_strided_slice %148 {offsets = [0, 0], sizes = [8, 1], strides = [1, 1]} : vector<32x1xf32> to vector<8x1xf32>
    %150 = vector.extract_strided_slice %148 {offsets = [8, 0], sizes = [8, 1], strides = [1, 1]} : vector<32x1xf32> to vector<8x1xf32>
    %151 = arith.addf %149, %150 : vector<8x1xf32>
    %152 = vector.extract_strided_slice %148 {offsets = [16, 0], sizes = [8, 1], strides = [1, 1]} : vector<32x1xf32> to vector<8x1xf32>
    %153 = arith.addf %151, %152 : vector<8x1xf32>
    %154 = vector.extract_strided_slice %148 {offsets = [24, 0], sizes = [8, 1], strides = [1, 1]} : vector<32x1xf32> to vector<8x1xf32>
    %155 = arith.addf %153, %154 : vector<8x1xf32>
    %cst_154 = arith.constant 3.906250e-03 : f32
    %156 = vector.broadcast %cst_154 : f32 to vector<8x1xf32>
    %157 = arith.mulf %155, %156 : vector<8x1xf32>
    %c0_155 = arith.constant 0 : index
    %c0_156 = arith.constant 0 : index
    %158 = vector.load %arg15[%c0_155, %c0_156] : memref<8x2xf32, #tpu.memory_space<vmem>>, vector<8x2xf32>
    %159 = vector.broadcast %157 : vector<8x1xf32> to vector<8x2xf32>
    %160 = arith.mulf %158, %159 : vector<8x2xf32>
    %cst_157 = arith.constant dense<0.000000e+00> : vector<2xf32>
    %161 = vector.multi_reduction <add>, %160, %cst_157 [0] : vector<8x2xf32> to vector<2xf32>
    %162 = vector.shape_cast %161 : vector<2xf32> to vector<1x2xf32>
    %c0_158 = arith.constant 0 : index
    %c0_159 = arith.constant 0 : index
    %163 = vector.load %arg16[%c0_158, %c0_159] : memref<1x2xf32, #tpu.memory_space<vmem>>, vector<1x2xf32>
    %164 = arith.addf %162, %163 : vector<1x2xf32>
    %cst_160 = arith.constant 0.000000e+00 : f32
    %165 = vector.broadcast %cst_160 : f32 to vector<1x2xf32>
    %166 = arith.maximumf %164, %165 : vector<1x2xf32>
    %c0_161 = arith.constant 0 : index
    %c0_162 = arith.constant 0 : index
    %167 = vector.load %arg17[%c0_161, %c0_162] : memref<8x2xf32, #tpu.memory_space<vmem>>, vector<8x2xf32>
    %168 = vector.broadcast %166 : vector<1x2xf32> to vector<8x2xf32>
    %169 = arith.mulf %167, %168 : vector<8x2xf32>
    %cst_163 = arith.constant dense<0.000000e+00> : vector<8xf32>
    %170 = vector.multi_reduction <add>, %169, %cst_163 [1] : vector<8x2xf32> to vector<8xf32>
    %171 = vector.shape_cast %170 : vector<8xf32> to vector<8x1xf32>
    %c0_164 = arith.constant 0 : index
    %c0_165 = arith.constant 0 : index
    %172 = vector.load %arg18[%c0_164, %c0_165] : memref<8x1xf32, #tpu.memory_space<vmem>>, vector<8x1xf32>
    %173 = arith.addf %171, %172 : vector<8x1xf32>
    %174 = arith.negf %173 : vector<8x1xf32>
    %175 = math.exp %174 : vector<8x1xf32>
    %cst_166 = arith.constant 1.000000e+00 : f32
    %176 = vector.broadcast %cst_166 : f32 to vector<8x1xf32>
    %177 = arith.addf %176, %175 : vector<8x1xf32>
    %178 = arith.divf %176, %177 : vector<8x1xf32>
    %179 = vector.extract_strided_slice %146 {offsets = [0, 0], sizes = [8, 128], strides = [1, 1]} : vector<32x128xf32> to vector<8x128xf32>
    %180 = vector.broadcast %178 : vector<8x1xf32> to vector<8x128xf32>
    %181 = arith.mulf %179, %180 : vector<8x128xf32>
    %c0_167 = arith.constant 0 : index
    %c128_168 = arith.constant 128 : index
    %182 = vector.load %arg21[%c0_167, %c128_168] : memref<32x384xf32, #tpu.memory_space<vmem>>, vector<8x128xf32>
    tpu.vector_store %arg21[%c0_167, %c128_168], %181 {strides = array<i32>} : memref<32x384xf32, #tpu.memory_space<vmem>>, vector<8x128xf32>,
    %183 = vector.extract_strided_slice %146 {offsets = [8, 0], sizes = [8, 128], strides = [1, 1]} : vector<32x128xf32> to vector<8x128xf32>
    %184 = vector.broadcast %178 : vector<8x1xf32> to vector<8x128xf32>
    %185 = arith.mulf %183, %184 : vector<8x128xf32>
    %c8_169 = arith.constant 8 : index
    %c128_170 = arith.constant 128 : index
    %186 = vector.load %arg21[%c8_169, %c128_170] : memref<32x384xf32, #tpu.memory_space<vmem>>, vector<8x128xf32>
    tpu.vector_store %arg21[%c8_169, %c128_170], %185 {strides = array<i32>} : memref<32x384xf32, #tpu.memory_space<vmem>>, vector<8x128xf32>,
    %187 = vector.extract_strided_slice %146 {offsets = [16, 0], sizes = [8, 128], strides = [1, 1]} : vector<32x128xf32> to vector<8x128xf32>
    %188 = vector.broadcast %178 : vector<8x1xf32> to vector<8x128xf32>
    %189 = arith.mulf %187, %188 : vector<8x128xf32>
    %c16_171 = arith.constant 16 : index
    %c128_172 = arith.constant 128 : index
    %190 = vector.load %arg21[%c16_171, %c128_172] : memref<32x384xf32, #tpu.memory_space<vmem>>, vector<8x128xf32>
    tpu.vector_store %arg21[%c16_171, %c128_172], %189 {strides = array<i32>} : memref<32x384xf32, #tpu.memory_space<vmem>>, vector<8x128xf32>,
    %191 = vector.extract_strided_slice %146 {offsets = [24, 0], sizes = [8, 128], strides = [1, 1]} : vector<32x128xf32> to vector<8x128xf32>
    %192 = vector.broadcast %178 : vector<8x1xf32> to vector<8x128xf32>
    %193 = arith.mulf %191, %192 : vector<8x128xf32>
    %c24_173 = arith.constant 24 : index
    %c128_174 = arith.constant 128 : index
    %194 = vector.load %arg21[%c24_173, %c128_174] : memref<32x384xf32, #tpu.memory_space<vmem>>, vector<8x128xf32>
    tpu.vector_store %arg21[%c24_173, %c128_174], %193 {strides = array<i32>} : memref<32x384xf32, #tpu.memory_space<vmem>>, vector<8x128xf32>,
    %c24_175 = arith.constant 24 : index
    %c118_176 = arith.constant 118 : index
    %195 = vector.load %arg21[%c24_175, %c118_176] : memref<32x384xf32, #tpu.memory_space<vmem>>, vector<8x128xf32>
    %c0_177 = arith.constant 0 : index
    %c0_178 = arith.constant 0 : index
    %196 = vector.load %arg22[%c0_177, %c0_178] : memref<144x128xf32, #tpu.memory_space<vmem>>, vector<8x128xf32>
    tpu.vector_store %arg22[%c0_177, %c0_178], %195 {strides = array<i32>} : memref<144x128xf32, #tpu.memory_space<vmem>>, vector<8x128xf32>,
    %c16_179 = arith.constant 16 : index
    %c119_180 = arith.constant 119 : index
    %197 = vector.load %arg21[%c16_179, %c119_180] : memref<32x384xf32, #tpu.memory_space<vmem>>, vector<8x128xf32>
    %c8_181 = arith.constant 8 : index
    %c0_182 = arith.constant 0 : index
    %198 = vector.load %arg22[%c8_181, %c0_182] : memref<144x128xf32, #tpu.memory_space<vmem>>, vector<8x128xf32>
    tpu.vector_store %arg22[%c8_181, %c0_182], %197 {strides = array<i32>} : memref<144x128xf32, #tpu.memory_space<vmem>>, vector<8x128xf32>,
    %c24_183 = arith.constant 24 : index
    %c119_184 = arith.constant 119 : index
    %199 = vector.load %arg21[%c24_183, %c119_184] : memref<32x384xf32, #tpu.memory_space<vmem>>, vector<8x128xf32>
    %c16_185 = arith.constant 16 : index
    %c0_186 = arith.constant 0 : index
    %200 = vector.load %arg22[%c16_185, %c0_186] : memref<144x128xf32, #tpu.memory_space<vmem>>, vector<8x128xf32>
    tpu.vector_store %arg22[%c16_185, %c0_186], %199 {strides = array<i32>} : memref<144x128xf32, #tpu.memory_space<vmem>>, vector<8x128xf32>,
    %c16_187 = arith.constant 16 : index
    %c120_188 = arith.constant 120 : index
    %201 = vector.load %arg21[%c16_187, %c120_188] : memref<32x384xf32, #tpu.memory_space<vmem>>, vector<8x128xf32>
    %c24_189 = arith.constant 24 : index
    %c0_190 = arith.constant 0 : index
    %202 = vector.load %arg22[%c24_189, %c0_190] : memref<144x128xf32, #tpu.memory_space<vmem>>, vector<8x128xf32>
    tpu.vector_store %arg22[%c24_189, %c0_190], %201 {strides = array<i32>} : memref<144x128xf32, #tpu.memory_space<vmem>>, vector<8x128xf32>,
    %c8_191 = arith.constant 8 : index
    %c127_192 = arith.constant 127 : index
    %203 = vector.load %arg21[%c8_191, %c127_192] : memref<32x384xf32, #tpu.memory_space<vmem>>, vector<8x128xf32>
    %c32_193 = arith.constant 32 : index
    %c0_194 = arith.constant 0 : index
    %204 = vector.load %arg22[%c32_193, %c0_194] : memref<144x128xf32, #tpu.memory_space<vmem>>, vector<8x128xf32>
    tpu.vector_store %arg22[%c32_193, %c0_194], %203 {strides = array<i32>} : memref<144x128xf32, #tpu.memory_space<vmem>>, vector<8x128xf32>,
    %c0_195 = arith.constant 0 : index
    %c128_196 = arith.constant 128 : index
    %205 = vector.load %arg21[%c0_195, %c128_196] : memref<32x384xf32, #tpu.memory_space<vmem>>, vector<8x128xf32>
    %c40_197 = arith.constant 40 : index
    %c0_198 = arith.constant 0 : index
    %206 = vector.load %arg22[%c40_197, %c0_198] : memref<144x128xf32, #tpu.memory_space<vmem>>, vector<8x128xf32>
    tpu.vector_store %arg22[%c40_197, %c0_198], %205 {strides = array<i32>} : memref<144x128xf32, #tpu.memory_space<vmem>>, vector<8x128xf32>,
    %c8_199 = arith.constant 8 : index
    %c128_200 = arith.constant 128 : index
    %207 = vector.load %arg21[%c8_199, %c128_200] : memref<32x384xf32, #tpu.memory_space<vmem>>, vector<8x128xf32>
    %c48_201 = arith.constant 48 : index
    %c0_202 = arith.constant 0 : index
    %208 = vector.load %arg22[%c48_201, %c0_202] : memref<144x128xf32, #tpu.memory_space<vmem>>, vector<8x128xf32>
    tpu.vector_store %arg22[%c48_201, %c0_202], %207 {strides = array<i32>} : memref<144x128xf32, #tpu.memory_space<vmem>>, vector<8x128xf32>,
    %c0_203 = arith.constant 0 : index
    %c129_204 = arith.constant 129 : index
    %209 = vector.load %arg21[%c0_203, %c129_204] : memref<32x384xf32, #tpu.memory_space<vmem>>, vector<8x128xf32>
    %c56_205 = arith.constant 56 : index
    %c0_206 = arith.constant 0 : index
    %210 = vector.load %arg22[%c56_205, %c0_206] : memref<144x128xf32, #tpu.memory_space<vmem>>, vector<8x128xf32>
    tpu.vector_store %arg22[%c56_205, %c0_206], %209 {strides = array<i32>} : memref<144x128xf32, #tpu.memory_space<vmem>>, vector<8x128xf32>,
    %c24_207 = arith.constant 24 : index
    %c127_208 = arith.constant 127 : index
    %211 = vector.load %arg21[%c24_207, %c127_208] : memref<32x384xf32, #tpu.memory_space<vmem>>, vector<8x128xf32>
    %c64_209 = arith.constant 64 : index
    %c0_210 = arith.constant 0 : index
    %212 = vector.load %arg22[%c64_209, %c0_210] : memref<144x128xf32, #tpu.memory_space<vmem>>, vector<8x128xf32>
    tpu.vector_store %arg22[%c64_209, %c0_210], %211 {strides = array<i32>} : memref<144x128xf32, #tpu.memory_space<vmem>>, vector<8x128xf32>,
    %c16_211 = arith.constant 16 : index
    %c128_212 = arith.constant 128 : index
    %213 = vector.load %arg21[%c16_211, %c128_212] : memref<32x384xf32, #tpu.memory_space<vmem>>, vector<8x128xf32>
    %c72 = arith.constant 72 : index
    %c0_213 = arith.constant 0 : index
    %214 = vector.load %arg22[%c72, %c0_213] : memref<144x128xf32, #tpu.memory_space<vmem>>, vector<8x128xf32>
    tpu.vector_store %arg22[%c72, %c0_213], %213 {strides = array<i32>} : memref<144x128xf32, #tpu.memory_space<vmem>>, vector<8x128xf32>,
    %c24_214 = arith.constant 24 : index
    %c128_215 = arith.constant 128 : index
    %215 = vector.load %arg21[%c24_214, %c128_215] : memref<32x384xf32, #tpu.memory_space<vmem>>, vector<8x128xf32>
    %c80_216 = arith.constant 80 : index
    %c0_217 = arith.constant 0 : index
    %216 = vector.load %arg22[%c80_216, %c0_217] : memref<144x128xf32, #tpu.memory_space<vmem>>, vector<8x128xf32>
    tpu.vector_store %arg22[%c80_216, %c0_217], %215 {strides = array<i32>} : memref<144x128xf32, #tpu.memory_space<vmem>>, vector<8x128xf32>,
    %c16_218 = arith.constant 16 : index
    %c129_219 = arith.constant 129 : index
    %217 = vector.load %arg21[%c16_218, %c129_219] : memref<32x384xf32, #tpu.memory_space<vmem>>, vector<8x128xf32>
    %c88 = arith.constant 88 : index
    %c0_220 = arith.constant 0 : index
    %218 = vector.load %arg22[%c88, %c0_220] : memref<144x128xf32, #tpu.memory_space<vmem>>, vector<8x128xf32>
    tpu.vector_store %arg22[%c88, %c0_220], %217 {strides = array<i32>} : memref<144x128xf32, #tpu.memory_space<vmem>>, vector<8x128xf32>,
    %c8_221 = arith.constant 8 : index
    %c136_222 = arith.constant 136 : index
    %219 = vector.load %arg21[%c8_221, %c136_222] : memref<32x384xf32, #tpu.memory_space<vmem>>, vector<8x128xf32>
    %c96_223 = arith.constant 96 : index
    %c0_224 = arith.constant 0 : index
    %220 = vector.load %arg22[%c96_223, %c0_224] : memref<144x128xf32, #tpu.memory_space<vmem>>, vector<8x128xf32>
    tpu.vector_store %arg22[%c96_223, %c0_224], %219 {strides = array<i32>} : memref<144x128xf32, #tpu.memory_space<vmem>>, vector<8x128xf32>,
    %c0_225 = arith.constant 0 : index
    %c137_226 = arith.constant 137 : index
    %221 = vector.load %arg21[%c0_225, %c137_226] : memref<32x384xf32, #tpu.memory_space<vmem>>, vector<8x128xf32>
    %c104 = arith.constant 104 : index
    %c0_227 = arith.constant 0 : index
    %222 = vector.load %arg22[%c104, %c0_227] : memref<144x128xf32, #tpu.memory_space<vmem>>, vector<8x128xf32>
    tpu.vector_store %arg22[%c104, %c0_227], %221 {strides = array<i32>} : memref<144x128xf32, #tpu.memory_space<vmem>>, vector<8x128xf32>,
    %c8_228 = arith.constant 8 : index
    %c137_229 = arith.constant 137 : index
    %223 = vector.load %arg21[%c8_228, %c137_229] : memref<32x384xf32, #tpu.memory_space<vmem>>, vector<8x128xf32>
    %c112_230 = arith.constant 112 : index
    %c0_231 = arith.constant 0 : index
    %224 = vector.load %arg22[%c112_230, %c0_231] : memref<144x128xf32, #tpu.memory_space<vmem>>, vector<8x128xf32>
    tpu.vector_store %arg22[%c112_230, %c0_231], %223 {strides = array<i32>} : memref<144x128xf32, #tpu.memory_space<vmem>>, vector<8x128xf32>,
    %c0_232 = arith.constant 0 : index
    %c138_233 = arith.constant 138 : index
    %225 = vector.load %arg21[%c0_232, %c138_233] : memref<32x384xf32, #tpu.memory_space<vmem>>, vector<8x128xf32>
    %c120_234 = arith.constant 120 : index
    %c0_235 = arith.constant 0 : index
    %226 = vector.load %arg22[%c120_234, %c0_235] : memref<144x128xf32, #tpu.memory_space<vmem>>, vector<8x128xf32>
    tpu.vector_store %arg22[%c120_234, %c0_235], %225 {strides = array<i32>} : memref<144x128xf32, #tpu.memory_space<vmem>>, vector<8x128xf32>,
    %c0_236 = arith.constant 0 : index
    %c0_237 = arith.constant 0 : index
    %227 = vector.load %arg9[%c0_236, %c0_237] : memref<64x128xf32, #tpu.memory_space<vmem>>, vector<64x128xf32>
    %c0_238 = arith.constant 0 : index
    %c0_239 = arith.constant 0 : index
    %228 = vector.load %arg22[%c0_238, %c0_239] : memref<144x128xf32, #tpu.memory_space<vmem>>, vector<128x128xf32>
    %cst_240 = arith.constant dense<0.000000e+00> : vector<64x128xf32>
    %229 = tpu.matmul %227, %228, %cst_240 {dimension_numbers = #tpu.dot_dimension_numbers<[1], [0], [0], [1], [0, 0, 1, 1], [], []>} : vector<64x128xf32>, vector<128x128xf32>, vector<64x128xf32> -> vector<64x128xf32>
    %c0_241 = arith.constant 0 : index
    %c0_242 = arith.constant 0 : index
    %230 = vector.load %arg10[%c0_241, %c0_242] : memref<64x1xf32, #tpu.memory_space<vmem>>, vector<64x1xf32>
    %231 = vector.broadcast %230 : vector<64x1xf32> to vector<64x128xf32>
    %232 = arith.addf %229, %231 : vector<64x128xf32>
    %c0_243 = arith.constant 0 : index
    %c0_244 = arith.constant 0 : index
    %c128_245 = arith.constant 128 : index
    %233 = vector.load %arg1[%c0_243, %c0_244, %c128_245] : memref<1x64x384xf32, #tpu.memory_space<vmem>>, vector<1x64x128xf32>
    %234 = vector.shape_cast %233 : vector<1x64x128xf32> to vector<64x128xf32>
    %235 = arith.addf %232, %234 : vector<64x128xf32>
    %c0_246 = arith.constant 0 : index
    %c0_247 = arith.constant 0 : index
    %c0_248 = arith.constant 0 : index
    %236 = vector.load %arg19[%c0_246, %c0_247, %c0_248] : memref<1x64x128xf32, #tpu.memory_space<vmem>>, vector<1x64x128xf32>
    %237 = vector.shape_cast %236 : vector<1x64x128xf32> to vector<64x128xf32>
    %238 = vector.shape_cast %235 : vector<64x128xf32> to vector<1x64x128xf32>
    tpu.vector_store %arg19[%c0_246, %c0_247, %c0_248], %238 {strides = array<i32>} : memref<1x64x128xf32, #tpu.memory_space<vmem>>, vector<1x64x128xf32>,
    return
  }
  func.func @transform_0(%arg0: i32) -> (i32, i32, i32) {
    %c0_i32 = arith.constant 0 : i32
    %c0_i32_0 = arith.constant 0 : i32
    %c0_i32_1 = arith.constant 0 : i32
    return %arg0, %c0_i32, %c0_i32_0 : i32, i32, i32
  }
  func.func @transform_1(%arg0: i32) -> (i32, i32) {
    %c0_i32 = arith.constant 0 : i32
    %c0_i32_0 = arith.constant 0 : i32
    %c0_i32_1 = arith.constant 0 : i32
    return %c0_i32, %c0_i32_0 : i32, i32
  }
  func.func @transform_2(%arg0: i32) -> (i32, i32) {
    %c0_i32 = arith.constant 0 : i32
    %c0_i32_0 = arith.constant 0 : i32
    %c0_i32_1 = arith.constant 0 : i32
    return %c0_i32, %c0_i32_0 : i32, i32
  }
  func.func @transform_3(%arg0: i32) -> (i32, i32) {
    %c0_i32 = arith.constant 0 : i32
    %c0_i32_0 = arith.constant 0 : i32
    %c0_i32_1 = arith.constant 0 : i32
    return %c0_i32, %c0_i32_0 : i32, i32
  }
  func.func @transform_4(%arg0: i32) -> (i32, i32) {
    %c0_i32 = arith.constant 0 : i32
    %c0_i32_0 = arith.constant 0 : i32
    %c0_i32_1 = arith.constant 0 : i32
    return %c0_i32, %c0_i32_0 : i32, i32
  }
  func.func @transform_5(%arg0: i32) -> (i32, i32) {
    %c0_i32 = arith.constant 0 : i32
    %c0_i32_0 = arith.constant 0 : i32
    %c0_i32_1 = arith.constant 0 : i32
    return %c0_i32, %c0_i32_0 : i32, i32
  }
  func.func @transform_6(%arg0: i32) -> (i32, i32) {
    %c0_i32 = arith.constant 0 : i32
    %c0_i32_0 = arith.constant 0 : i32
    %c0_i32_1 = arith.constant 0 : i32
    return %c0_i32, %c0_i32_0 : i32, i32
  }
  func.func @transform_7(%arg0: i32) -> (i32, i32) {
    %c0_i32 = arith.constant 0 : i32
    %c0_i32_0 = arith.constant 0 : i32
    %c0_i32_1 = arith.constant 0 : i32
    return %c0_i32, %c0_i32_0 : i32, i32
  }
  func.func @transform_8(%arg0: i32) -> (i32, i32) {
    %c0_i32 = arith.constant 0 : i32
    %c0_i32_0 = arith.constant 0 : i32
    %c0_i32_1 = arith.constant 0 : i32
    return %c0_i32, %c0_i32_0 : i32, i32
  }
  func.func @transform_9(%arg0: i32) -> (i32, i32) {
    %c0_i32 = arith.constant 0 : i32
    %c0_i32_0 = arith.constant 0 : i32
    %c0_i32_1 = arith.constant 0 : i32
    return %c0_i32, %c0_i32_0 : i32, i32
  }
  func.func @transform_10(%arg0: i32) -> (i32, i32) {
    %c0_i32 = arith.constant 0 : i32
    %c0_i32_0 = arith.constant 0 : i32
    %c0_i32_1 = arith.constant 0 : i32
    return %c0_i32, %c0_i32_0 : i32, i32
  }
  func.func @transform_11(%arg0: i32) -> (i32, i32) {
    %c0_i32 = arith.constant 0 : i32
    %c0_i32_0 = arith.constant 0 : i32
    %c0_i32_1 = arith.constant 0 : i32
    return %c0_i32, %c0_i32_0 : i32, i32
  }
  func.func @transform_12(%arg0: i32) -> (i32, i32) {
    %c0_i32 = arith.constant 0 : i32
    %c0_i32_0 = arith.constant 0 : i32
    %c0_i32_1 = arith.constant 0 : i32
    return %c0_i32, %c0_i32_0 : i32, i32
  }
  func.func @transform_13(%arg0: i32) -> (i32, i32) {
    %c0_i32 = arith.constant 0 : i32
    %c0_i32_0 = arith.constant 0 : i32
    %c0_i32_1 = arith.constant 0 : i32
    return %c0_i32, %c0_i32_0 : i32, i32
  }
  func.func @transform_14(%arg0: i32) -> (i32, i32) {
    %c0_i32 = arith.constant 0 : i32
    %c0_i32_0 = arith.constant 0 : i32
    %c0_i32_1 = arith.constant 0 : i32
    return %c0_i32, %c0_i32_0 : i32, i32
  }
  func.func @transform_15(%arg0: i32) -> (i32, i32) {
    %c0_i32 = arith.constant 0 : i32
    %c0_i32_0 = arith.constant 0 : i32
    %c0_i32_1 = arith.constant 0 : i32
    return %c0_i32, %c0_i32_0 : i32, i32
  }
  func.func @transform_16(%arg0: i32) -> (i32, i32) {
    %c0_i32 = arith.constant 0 : i32
    %c0_i32_0 = arith.constant 0 : i32
    %c0_i32_1 = arith.constant 0 : i32
    return %c0_i32, %c0_i32_0 : i32, i32
  }
  func.func @transform_17(%arg0: i32) -> (i32, i32) {
    %c0_i32 = arith.constant 0 : i32
    %c0_i32_0 = arith.constant 0 : i32
    %c0_i32_1 = arith.constant 0 : i32
    return %c0_i32, %c0_i32_0 : i32, i32
  }
  func.func @transform_18(%arg0: i32) -> (i32, i32, i32) {
    %c0_i32 = arith.constant 0 : i32
    %c0_i32_0 = arith.constant 0 : i32
    %c0_i32_1 = arith.constant 0 : i32
    return %arg0, %c0_i32, %c0_i32_0 : i32, i32, i32
  }
}

</mosaic_0001>

<llo_original>
// kernel: tile.8
$region0: #{tile.8}
  #allocation0 [shape = 's32[1]{0}', space=sflag, size = 0x4, scoped, tag = 'scoped memory for tile.8']
  %s0 = inlined_call_operand.vmem [shape: f32[16], index: 0, kind: input, shape index: {}]
  %s1 = inlined_call_operand.vmem [shape: f32[4,16], index: 1, kind: output, shape index: {}]
  // Predicated region
  $region2: #{tile.8} parent=0 // pred_check
    _
  $region3: #{tile.8} parent=0 // pred_check_branch
    %3 = sbr.rel (0) target = $region5
  $region4: #{tile.8} parent=0 // pred_region
    _
  $region5: #{tile.8} parent=0 // pred_fallthru
    _
  %v4 = vld [vmem:[%s0] ss:$0 sm:$0xff]
  %5 = vst [vmem:[%s1] sm:$0xf] %v4

// kernel: tile.0
$region0: #{tile.0}
  %s0 = inlined_call_operand.vmem [shape: f32[4,16], index: 0, kind: input, shape index: {}]
  %s1 = inlined_call_operand.vmem [shape: f32[64,1], index: 1, kind: output, shape index: {}]
  $region1: #{tile.0} parent=0
    #allocation0 [shape = 'u8[4096]{0}', space=vmem, size = 0x1000, scoped, tag = 'scoped mem for input reshape']
    %s3 = sshll.u32 1, 4
    %s4 = ssub.s32 %s3, 1
    %v5 = vld [vmem:[%s0] sm:%s4]
    %6 = vst [vmem:[#allocation0] sm:%s4] %v5
    %v7 = vld [vmem:[#allocation0] sm:$0xf]
    %vm8 = vcmask 7168
    %9 = vst.msk [vmem:[%s1] ss:$16 sm:$0x3] %vm8, %v7
    %10 = vst.msk [vmem:[%s1] ss:$16 sm:$0xc] %vm8, %v7
    %v11 = vld [vmem:[#allocation0] sm:$0xf]
    %12 = vrot.lane.b32.xlu0 %v11, 127
    %v13 = vpop.permute.xlu0 %12
    %vm14 = vcmask 7168
    %s15 = scalar_lea.vmem %s1, 1
    %16 = vst.msk [vmem:[%s15] ss:$16 sm:$0x3] %vm14, %v13
    %s17 = scalar_lea.vmem %s1, 1
    %18 = vst.msk [vmem:[%s17] ss:$16 sm:$0xc] %vm14, %v13
    %v19 = vld [vmem:[#allocation0] sm:$0xf]
    %20 = vrot.lane.b32.xlu0 %v19, 126
    %v21 = vpop.permute.xlu0 %20
    %vm22 = vcmask 7168
    %s23 = scalar_lea.vmem %s1, 2
    %24 = vst.msk [vmem:[%s23] ss:$16 sm:$0x3] %vm22, %v21
    %s25 = scalar_lea.vmem %s1, 2
    %26 = vst.msk [vmem:[%s25] ss:$16 sm:$0xc] %vm22, %v21
    %v27 = vld [vmem:[#allocation0] sm:$0xf]
    %28 = vrot.lane.b32.xlu0 %v27, 125
    %v29 = vpop.permute.xlu0 %28
    %vm30 = vcmask 7168
    %s31 = scalar_lea.vmem %s1, 3
    %32 = vst.msk [vmem:[%s31] ss:$16 sm:$0x3] %vm30, %v29
    %s33 = scalar_lea.vmem %s1, 3
    %34 = vst.msk [vmem:[%s33] ss:$16 sm:$0xc] %vm30, %v29
    %v35 = vld [vmem:[#allocation0] sm:$0xf]
    %36 = vrot.lane.b32.xlu0 %v35, 124
    %v37 = vpop.permute.xlu0 %36
    %vm38 = vcmask 7168
    %s39 = scalar_lea.vmem %s1, 4
    %40 = vst.msk [vmem:[%s39] ss:$16 sm:$0x3] %vm38, %v37
    %s41 = scalar_lea.vmem %s1, 4
    %42 = vst.msk [vmem:[%s41] ss:$16 sm:$0xc] %vm38, %v37
    %v43 = vld [vmem:[#allocation0] sm:$0xf]
    %44 = vrot.lane.b32.xlu0 %v43, 123
    %v45 = vpop.permute.xlu0 %44
    %vm46 = vcmask 7168
    %s47 = scalar_lea.vmem %s1, 5
    %48 = vst.msk [vmem:[%s47] ss:$16 sm:$0x3] %vm46, %v45
    %s49 = scalar_lea.vmem %s1, 5
    %50 = vst.msk [vmem:[%s49] ss:$16 sm:$0xc] %vm46, %v45
    %v51 = vld [vmem:[#allocation0] sm:$0xf]
    %52 = vrot.lane.b32.xlu0 %v51, 122
    %v53 = vpop.permute.xlu0 %52
    %vm54 = vcmask 7168
    %s55 = scalar_lea.vmem %s1, 6
    %56 = vst.msk [vmem:[%s55] ss:$16 sm:$0x3] %vm54, %v53
    %s57 = scalar_lea.vmem %s1, 6
    %58 = vst.msk [vmem:[%s57] ss:$16 sm:$0xc] %vm54, %v53
    %v59 = vld [vmem:[#allocation0] sm:$0xf]
    %60 = vrot.lane.b32.xlu0 %v59, 121
    %v61 = vpop.permute.xlu0 %60
    %vm62 = vcmask 7168
    %s63 = scalar_lea.vmem %s1, 7
    %64 = vst.msk [vmem:[%s63] ss:$16 sm:$0x3] %vm62, %v61
    %s65 = scalar_lea.vmem %s1, 7
    %66 = vst.msk [vmem:[%s65] ss:$16 sm:$0xc] %vm62, %v61
    %v67 = vld [vmem:[#allocation0] sm:$0xf]
    %68 = vrot.lane.b32.xlu0 %v67, 120
    %v69 = vpop.permute.xlu0 %68
    %vm70 = vcmask 7168
    %s71 = scalar_lea.vmem %s1, 8
    %72 = vst.msk [vmem:[%s71] ss:$16 sm:$0x3] %vm70, %v69
    %s73 = scalar_lea.vmem %s1, 8
    %74 = vst.msk [vmem:[%s73] ss:$16 sm:$0xc] %vm70, %v69
    %v75 = vld [vmem:[#allocation0] sm:$0xf]
    %76 = vrot.lane.b32.xlu0 %v75, 119
    %v77 = vpop.permute.xlu0 %76
    %vm78 = vcmask 7168
    %s79 = scalar_lea.vmem %s1, 9
    %80 = vst.msk [vmem:[%s79] ss:$16 sm:$0x3] %vm78, %v77
    %s81 = scalar_lea.vmem %s1, 9
    %82 = vst.msk [vmem:[%s81] ss:$16 sm:$0xc] %vm78, %v77
    %v83 = vld [vmem:[#allocation0] sm:$0xf]
    %84 = vrot.lane.b32.xlu0 %v83, 118
    %v85 = vpop.permute.xlu0 %84
    %vm86 = vcmask 7168
    %s87 = scalar_lea.vmem %s1, 10
    %88 = vst.msk [vmem:[%s87] ss:$16 sm:$0x3] %vm86, %v85
    %s89 = scalar_lea.vmem %s1, 10
    %90 = vst.msk [vmem:[%s89] ss:$16 sm:$0xc] %vm86, %v85
    %v91 = vld [vmem:[#allocation0] sm:$0xf]
    %92 = vrot.lane.b32.xlu0 %v91, 117
    %v93 = vpop.permute.xlu0 %92
    %vm94 = vcmask 7168
    %s95 = scalar_lea.vmem %s1, 11
    %96 = vst.msk [vmem:[%s95] ss:$16 sm:$0x3] %vm94, %v93
    %s97 = scalar_lea.vmem %s1, 11
    %98 = vst.msk [vmem:[%s97] ss:$16 sm:$0xc] %vm94, %v93
    %v99 = vld [vmem:[#allocation0] sm:$0xf]
    %100 = vrot.lane.b32.xlu0 %v99, 116
    %v101 = vpop.permute.xlu0 %100
    %vm102 = vcmask 7168
    %s103 = scalar_lea.vmem %s1, 12
    %104 = vst.msk [vmem:[%s103] ss:$16 sm:$0x3] %vm102, %v101
    %s105 = scalar_lea.vmem %s1, 12
    %106 = vst.msk [vmem:[%s105] ss:$16 sm:$0xc] %vm102, %v101
    %v107 = vld [vmem:[#allocation0] sm:$0xf]
    %108 = vrot.lane.b32.xlu0 %v107, 115
    %v109 = vpop.permute.xlu0 %108
    %vm110 = vcmask 7168
    %s111 = scalar_lea.vmem %s1, 13
    %112 = vst.msk [vmem:[%s111] ss:$16 sm:$0x3] %vm110, %v109
    %s113 = scalar_lea.vmem %s1, 13
    %114 = vst.msk [vmem:[%s113] ss:$16 sm:$0xc] %vm110, %v109
    %v115 = vld [vmem:[#allocation0] sm:$0xf]
    %116 = vrot.lane.b32.xlu0 %v115, 114
    %v117 = vpop.permute.xlu0 %116
    %vm118 = vcmask 7168
    %s119 = scalar_lea.vmem %s1, 14
    %120 = vst.msk [vmem:[%s119] ss:$16 sm:$0x3] %vm118, %v117
    %s121 = scalar_lea.vmem %s1, 14
    %122 = vst.msk [vmem:[%s121] ss:$16 sm:$0xc] %vm118, %v117
    %v123 = vld [vmem:[#allocation0] sm:$0xf]
    %124 = vrot.lane.b32.xlu0 %v123, 113
    %v125 = vpop.permute.xlu0 %124
    %vm126 = vcmask 7168
    %s127 = scalar_lea.vmem %s1, 15
    %128 = vst.msk [vmem:[%s127] ss:$16 sm:$0x3] %vm126, %v125
    %s129 = scalar_lea.vmem %s1, 15
    %130 = vst.msk [vmem:[%s129] ss:$16 sm:$0xc] %vm126, %v125

// kernel: symmetric_forward.1
$region0: #{symmetric_forward.1}
  #allocation0 [shape = 'u32[]', space=smem, size = 0x4, offset = 0x4, fixed_abs, tag = 'smem constant byte address 0x4 - core index']
  #allocation1 [shape = 'u32[144,128]{1,0:T(1,128)}', space=vmem, size = 0x12000, scoped, tag = 'internal scratch']
  #allocation2 [shape = 'f32[8,384]{1,0:T(8,128)}', space=vmem, size = 0x3000, scoped, tag = 'scratch operand']
  #allocation3 [shape = 'f32[32,384]{1,0:T(8,128)}', space=vmem, size = 0xc000, scoped, tag = 'scratch operand']
  #allocation4 [shape = 'f32[144,128]{1,0:T(8,128)}', space=vmem, size = 0x12000, scoped, tag = 'scratch operand']
  %s0 = inlined_call_operand.vmem [shape: f32[2,64,384], index: 0, kind: input, shape index: {}]
  %s1 = inlined_call_operand.vmem [shape: f32[1,128], index: 1, kind: input, shape index: {}]
  %s2 = inlined_call_operand.vmem [shape: f32[8,144], index: 2, kind: input, shape index: {}]
  %s3 = inlined_call_operand.vmem [shape: f32[8,1], index: 3, kind: input, shape index: {}]
  %s4 = inlined_call_operand.vmem [shape: f32[8,72], index: 4, kind: input, shape index: {}]
  %s5 = inlined_call_operand.vmem [shape: f32[8,1], index: 5, kind: input, shape index: {}]
  %s6 = inlined_call_operand.vmem [shape: f32[32,72], index: 6, kind: input, shape index: {}]
  %s7 = inlined_call_operand.vmem [shape: f32[32,1], index: 7, kind: input, shape index: {}]
  %s8 = inlined_call_operand.vmem [shape: f32[64,128], index: 8, kind: input, shape index: {}]
  %s9 = inlined_call_operand.vmem [shape: f32[64,1], index: 9, kind: input, shape index: {}]
  %s10 = inlined_call_operand.vmem [shape: f32[8,2], index: 10, kind: input, shape index: {}]
  %s11 = inlined_call_operand.vmem [shape: f32[1,2], index: 11, kind: input, shape index: {}]
  %s12 = inlined_call_operand.vmem [shape: f32[8,2], index: 12, kind: input, shape index: {}]
  %s13 = inlined_call_operand.vmem [shape: f32[8,1], index: 13, kind: input, shape index: {}]
  %s14 = inlined_call_operand.vmem [shape: f32[8,2], index: 14, kind: input, shape index: {}]
  %s15 = inlined_call_operand.vmem [shape: f32[1,2], index: 15, kind: input, shape index: {}]
  %s16 = inlined_call_operand.vmem [shape: f32[8,2], index: 16, kind: input, shape index: {}]
  %s17 = inlined_call_operand.vmem [shape: f32[8,1], index: 17, kind: input, shape index: {}]
  %s18 = inlined_call_operand.vmem [shape: f32[2,64,128], index: 18, kind: output, shape index: {}]
  %s19 = sld [smem:[#allocation0]]
  $region105: #{symmetric_forward.1} parent=0
    _
  %s21 = ssub.s32 1, %s19
  %s22 = scalar_select 0, %s21, %s19
  loop: start=0, step=1, limit=4
  $region2: #{symmetric_forward.1} parent=0 // loop_pre_header
    _
  $region3: #{symmetric_forward.1} parent=0 // loop_header
    %s24 = sphi 0, %s28
    %p25 = scmp.ge.s32.totalorder %s24, 4
    %s34 = sphi 0, %s36
    %s37 = sphi 0, %s34
    %s38 = sphi 0, %s37
    %s54 = sphi 0, %s38
    %s58 = sphi 0, %s58
    %s60 = sphi 0, %s58
    %s61 = sphi 0, %s60
    %s75 = sphi 0, %s61
    %s79 = sphi 0, %s79
    %s81 = sphi 0, %s79
    %s82 = sphi 0, %s81
    %s96 = sphi 0, %s82
    %s100 = sphi 0, %s100
    %s102 = sphi 0, %s100
    %s103 = sphi 0, %s102
    %s117 = sphi 0, %s103
    %s121 = sphi 0, %s121
    %s123 = sphi 0, %s121
    %s124 = sphi 0, %s123
    %s138 = sphi 0, %s124
    %s142 = sphi 0, %s142
    %s144 = sphi 0, %s142
    %s145 = sphi 0, %s144
    %s159 = sphi 0, %s145
    %s163 = sphi 0, %s163
    %s165 = sphi 0, %s163
    %s166 = sphi 0, %s165
    %s180 = sphi 0, %s166
    %s184 = sphi 0, %s184
    %s186 = sphi 0, %s184
    %s187 = sphi 0, %s186
    %s201 = sphi 0, %s187
    %s205 = sphi 0, %s205
    %s207 = sphi 0, %s205
    %s208 = sphi 0, %s207
    %s222 = sphi 0, %s208
    %s226 = sphi 0, %s226
    %s228 = sphi 0, %s226
    %s229 = sphi 0, %s228
    %s243 = sphi 0, %s229
    %s247 = sphi 0, %s247
    %s249 = sphi 0, %s247
    %s250 = sphi 0, %s249
    %s264 = sphi 0, %s250
    %s268 = sphi 0, %s268
    %s270 = sphi 0, %s268
    %s271 = sphi 0, %s270
    %s285 = sphi 0, %s271
    %s289 = sphi 0, %s289
    %s291 = sphi 0, %s289
    %s292 = sphi 0, %s291
    %s306 = sphi 0, %s292
    %s310 = sphi 0, %s310
    %s312 = sphi 0, %s310
    %s313 = sphi 0, %s312
    %s327 = sphi 0, %s313
    %s331 = sphi 0, %s331
    %s333 = sphi 0, %s331
    %s334 = sphi 0, %s333
    %s348 = sphi 0, %s334
    %s352 = sphi 0, %s352
    %s354 = sphi 0, %s352
    %s355 = sphi 0, %s354
    %s369 = sphi 0, %s355
    %s373 = sphi 0, %s373
    %s375 = sphi 0, %s373
    %s376 = sphi 0, %s375
    %s390 = sphi 0, %s376
    %s394 = sphi 0, %s394
    %s396 = sphi 0, %s394
    %s397 = sphi 0, %s396
    %s411 = sphi 0, %s397
    %s417 = sphi 0, %s419
    %s420 = sphi 0, %s417
    %s421 = sphi 0, %s420
    %s437 = sphi 0, %s421
  $region4: #{symmetric_forward.1} parent=0 // loop_header_branch
    %27 = sbr.rel (%p25) target = $region8
  $region5: #{symmetric_forward.1} parent=0 // loop_body
    %s29 = ssub.s32 %s24, 1
    %s30 = ssub.s32 %s24, 2
    %s31 = sadd.s32 %s24, 1
    %s32 = ssub.s32 %s24, %s31
    %p33 = scmp.eq.s32.totalorder %s32, 0
    %s35 = sadd.s32 %s34, 1
    %s36 = scalar_select %p33, %s34, %s35
    %p39 = pneg %p33
    %p40 = scmp.eq.s32.totalorder %s24, 1
    %p41 = por %p39, %p40
    %p42 = scmp.ne.s32.totalorder %s34, %s37
    %p43 = scmp.eq.s32.totalorder %s24, 0
    %p44 = por %p42, %p43
    %p45 = scmp.ne.s32.totalorder %s34, %s37
    %p46 = scmp.eq.s32.totalorder %s29, 1
    %p47 = por %p45, %p46
    %p48 = scmp.ne.s32.totalorder %s37, %s38
    %p49 = scmp.eq.s32.totalorder %s29, 0
    %p50 = por %p48, %p49
    %p51 = scmp.ne.s32.totalorder %s37, %s38
    %p52 = scmp.eq.s32.totalorder %s30, 1
    %p53 = por %p51, %p52
    %p55 = scmp.ne.s32.totalorder %s38, %s54
    %p56 = scmp.eq.s32.totalorder %s30, 0
    %p57 = por %p55, %p56
    %s59 = sadd.s32 %s58, 1
    %p62 = scmp.eq.s32.totalorder %s24, 1
    %p63 = scmp.ne.s32.totalorder %s58, %s60
    %p64 = scmp.eq.s32.totalorder %s24, 0
    %p65 = por %p63, %p64
    %p66 = scmp.ne.s32.totalorder %s58, %s60
    %p67 = scmp.eq.s32.totalorder %s29, 1
    %p68 = por %p66, %p67
    %p69 = scmp.ne.s32.totalorder %s60, %s61
    %p70 = scmp.eq.s32.totalorder %s29, 0
    %p71 = por %p69, %p70
    %p72 = scmp.ne.s32.totalorder %s60, %s61
    %p73 = scmp.eq.s32.totalorder %s30, 1
    %p74 = por %p72, %p73
    %p76 = scmp.ne.s32.totalorder %s61, %s75
    %p77 = scmp.eq.s32.totalorder %s30, 0
    %p78 = por %p76, %p77
    %s80 = sadd.s32 %s79, 1
    %p83 = scmp.eq.s32.totalorder %s24, 1
    %p84 = scmp.ne.s32.totalorder %s79, %s81
    %p85 = scmp.eq.s32.totalorder %s24, 0
    %p86 = por %p84, %p85
    %p87 = scmp.ne.s32.totalorder %s79, %s81
    %p88 = scmp.eq.s32.totalorder %s29, 1
    %p89 = por %p87, %p88
    %p90 = scmp.ne.s32.totalorder %s81, %s82
    %p91 = scmp.eq.s32.totalorder %s29, 0
    %p92 = por %p90, %p91
    %p93 = scmp.ne.s32.totalorder %s81, %s82
    %p94 = scmp.eq.s32.totalorder %s30, 1
    %p95 = por %p93, %p94
    %p97 = scmp.ne.s32.totalorder %s82, %s96
    %p98 = scmp.eq.s32.totalorder %s30, 0
    %p99 = por %p97, %p98
    %s101 = sadd.s32 %s100, 1
    %p104 = scmp.eq.s32.totalorder %s24, 1
    %p105 = scmp.ne.s32.totalorder %s100, %s102
    %p106 = scmp.eq.s32.totalorder %s24, 0
    %p107 = por %p105, %p106
    %p108 = scmp.ne.s32.totalorder %s100, %s102
    %p109 = scmp.eq.s32.totalorder %s29, 1
    %p110 = por %p108, %p109
    %p111 = scmp.ne.s32.totalorder %s102, %s103
    %p112 = scmp.eq.s32.totalorder %s29, 0
    %p113 = por %p111, %p112
    %p114 = scmp.ne.s32.totalorder %s102, %s103
    %p115 = scmp.eq.s32.totalorder %s30, 1
    %p116 = por %p114, %p115
    %p118 = scmp.ne.s32.totalorder %s103, %s117
    %p119 = scmp.eq.s32.totalorder %s30, 0
    %p120 = por %p118, %p119
    %s122 = sadd.s32 %s121, 1
    %p125 = scmp.eq.s32.totalorder %s24, 1
    %p126 = scmp.ne.s32.totalorder %s121, %s123
    %p127 = scmp.eq.s32.totalorder %s24, 0
    %p128 = por %p126, %p127
    %p129 = scmp.ne.s32.totalorder %s121, %s123
    %p130 = scmp.eq.s32.totalorder %s29, 1
    %p131 = por %p129, %p130
    %p132 = scmp.ne.s32.totalorder %s123, %s124
    %p133 = scmp.eq.s32.totalorder %s29, 0
    %p134 = por %p132, %p133
    %p135 = scmp.ne.s32.totalorder %s123, %s124
    %p136 = scmp.eq.s32.totalorder %s30, 1
    %p137 = por %p135, %p136
    %p139 = scmp.ne.s32.totalorder %s124, %s138
    %p140 = scmp.eq.s32.totalorder %s30, 0
    %p141 = por %p139, %p140
    %s143 = sadd.s32 %s142, 1
    %p146 = scmp.eq.s32.totalorder %s24, 1
    %p147 = scmp.ne.s32.totalorder %s142, %s144
    %p148 = scmp.eq.s32.totalorder %s24, 0
    %p149 = por %p147, %p148
    %p150 = scmp.ne.s32.totalorder %s142, %s144
    %p151 = scmp.eq.s32.totalorder %s29, 1
    %p152 = por %p150, %p151
    %p153 = scmp.ne.s32.totalorder %s144, %s145
    %p154 = scmp.eq.s32.totalorder %s29, 0
    %p155 = por %p153, %p154
    %p156 = scmp.ne.s32.totalorder %s144, %s145
    %p157 = scmp.eq.s32.totalorder %s30, 1
    %p158 = por %p156, %p157
    %p160 = scmp.ne.s32.totalorder %s145, %s159
    %p161 = scmp.eq.s32.totalorder %s30, 0
    %p162 = por %p160, %p161
    %s164 = sadd.s32 %s163, 1
    %p167 = scmp.eq.s32.totalorder %s24, 1
    %p168 = scmp.ne.s32.totalorder %s163, %s165
    %p169 = scmp.eq.s32.totalorder %s24, 0
    %p170 = por %p168, %p169
    %p171 = scmp.ne.s32.totalorder %s163, %s165
    %p172 = scmp.eq.s32.totalorder %s29, 1
    %p173 = por %p171, %p172
    %p174 = scmp.ne.s32.totalorder %s165, %s166
    %p175 = scmp.eq.s32.totalorder %s29, 0
    %p176 = por %p174, %p175
    %p177 = scmp.ne.s32.totalorder %s165, %s166
    %p178 = scmp.eq.s32.totalorder %s30, 1
    %p179 = por %p177, %p178
    %p181 = scmp.ne.s32.totalorder %s166, %s180
    %p182 = scmp.eq.s32.totalorder %s30, 0
    %p183 = por %p181, %p182
    %s185 = sadd.s32 %s184, 1
    %p188 = scmp.eq.s32.totalorder %s24, 1
    %p189 = scmp.ne.s32.totalorder %s184, %s186
    %p190 = scmp.eq.s32.totalorder %s24, 0
    %p191 = por %p189, %p190
    %p192 = scmp.ne.s32.totalorder %s184, %s186
    %p193 = scmp.eq.s32.totalorder %s29, 1
    %p194 = por %p192, %p193
    %p195 = scmp.ne.s32.totalorder %s186, %s187
    %p196 = scmp.eq.s32.totalorder %s29, 0
    %p197 = por %p195, %p196
    %p198 = scmp.ne.s32.totalorder %s186, %s187
    %p199 = scmp.eq.s32.totalorder %s30, 1
    %p200 = por %p198, %p199
    %p202 = scmp.ne.s32.totalorder %s187, %s201
    %p203 = scmp.eq.s32.totalorder %s30, 0
    %p204 = por %p202, %p203
    %s206 = sadd.s32 %s205, 1
    %p209 = scmp.eq.s32.totalorder %s24, 1
    %p210 = scmp.ne.s32.totalorder %s205, %s207
    %p211 = scmp.eq.s32.totalorder %s24, 0
    %p212 = por %p210, %p211
    %p213 = scmp.ne.s32.totalorder %s205, %s207
    %p214 = scmp.eq.s32.totalorder %s29, 1
    %p215 = por %p213, %p214
    %p216 = scmp.ne.s32.totalorder %s207, %s208
    %p217 = scmp.eq.s32.totalorder %s29, 0
    %p218 = por %p216, %p217
    %p219 = scmp.ne.s32.totalorder %s207, %s208
    %p220 = scmp.eq.s32.totalorder %s30, 1
    %p221 = por %p219, %p220
    %p223 = scmp.ne.s32.totalorder %s208, %s222
    %p224 = scmp.eq.s32.totalorder %s30, 0
    %p225 = por %p223, %p224
    %s227 = sadd.s32 %s226, 1
    %p230 = scmp.eq.s32.totalorder %s24, 1
    %p231 = scmp.ne.s32.totalorder %s226, %s228
    %p232 = scmp.eq.s32.totalorder %s24, 0
    %p233 = por %p231, %p232
    %p234 = scmp.ne.s32.totalorder %s226, %s228
    %p235 = scmp.eq.s32.totalorder %s29, 1
    %p236 = por %p234, %p235
    %p237 = scmp.ne.s32.totalorder %s228, %s229
    %p238 = scmp.eq.s32.totalorder %s29, 0
    %p239 = por %p237, %p238
    %p240 = scmp.ne.s32.totalorder %s228, %s229
    %p241 = scmp.eq.s32.totalorder %s30, 1
    %p242 = por %p240, %p241
    %p244 = scmp.ne.s32.totalorder %s229, %s243
    %p245 = scmp.eq.s32.totalorder %s30, 0
    %p246 = por %p244, %p245
    %s248 = sadd.s32 %s247, 1
    %p251 = scmp.eq.s32.totalorder %s24, 1
    %p252 = scmp.ne.s32.totalorder %s247, %s249
    %p253 = scmp.eq.s32.totalorder %s24, 0
    %p254 = por %p252, %p253
    %p255 = scmp.ne.s32.totalorder %s247, %s249
    %p256 = scmp.eq.s32.totalorder %s29, 1
    %p257 = por %p255, %p256
    %p258 = scmp.ne.s32.totalorder %s249, %s250
    %p259 = scmp.eq.s32.totalorder %s29, 0
    %p260 = por %p258, %p259
    %p261 = scmp.ne.s32.totalorder %s249, %s250
    %p262 = scmp.eq.s32.totalorder %s30, 1
    %p263 = por %p261, %p262
    %p265 = scmp.ne.s32.totalorder %s250, %s264
    %p266 = scmp.eq.s32.totalorder %s30, 0
    %p267 = por %p265, %p266
    %s269 = sadd.s32 %s268, 1
    %p272 = scmp.eq.s32.totalorder %s24, 1
    %p273 = scmp.ne.s32.totalorder %s268, %s270
    %p274 = scmp.eq.s32.totalorder %s24, 0
    %p275 = por %p273, %p274
    %p276 = scmp.ne.s32.totalorder %s268, %s270
    %p277 = scmp.eq.s32.totalorder %s29, 1
    %p278 = por %p276, %p277
    %p279 = scmp.ne.s32.totalorder %s270, %s271
    %p280 = scmp.eq.s32.totalorder %s29, 0
    %p281 = por %p279, %p280
    %p282 = scmp.ne.s32.totalorder %s270, %s271
    %p283 = scmp.eq.s32.totalorder %s30, 1
    %p284 = por %p282, %p283
    %p286 = scmp.ne.s32.totalorder %s271, %s285
    %p287 = scmp.eq.s32.totalorder %s30, 0
    %p288 = por %p286, %p287
    %s290 = sadd.s32 %s289, 1
    %p293 = scmp.eq.s32.totalorder %s24, 1
    %p294 = scmp.ne.s32.totalorder %s289, %s291
    %p295 = scmp.eq.s32.totalorder %s24, 0
    %p296 = por %p294, %p295
    %p297 = scmp.ne.s32.totalorder %s289, %s291
    %p298 = scmp.eq.s32.totalorder %s29, 1
    %p299 = por %p297, %p298
    %p300 = scmp.ne.s32.totalorder %s291, %s292
    %p301 = scmp.eq.s32.totalorder %s29, 0
    %p302 = por %p300, %p301
    %p303 = scmp.ne.s32.totalorder %s291, %s292
    %p304 = scmp.eq.s32.totalorder %s30, 1
    %p305 = por %p303, %p304
    %p307 = scmp.ne.s32.totalorder %s292, %s306
    %p308 = scmp.eq.s32.totalorder %s30, 0
    %p309 = por %p307, %p308
    %s311 = sadd.s32 %s310, 1
    %p314 = scmp.eq.s32.totalorder %s24, 1
    %p315 = scmp.ne.s32.totalorder %s310, %s312
    %p316 = scmp.eq.s32.totalorder %s24, 0
    %p317 = por %p315, %p316
    %p318 = scmp.ne.s32.totalorder %s310, %s312
    %p319 = scmp.eq.s32.totalorder %s29, 1
    %p320 = por %p318, %p319
    %p321 = scmp.ne.s32.totalorder %s312, %s313
    %p322 = scmp.eq.s32.totalorder %s29, 0
    %p323 = por %p321, %p322
    %p324 = scmp.ne.s32.totalorder %s312, %s313
    %p325 = scmp.eq.s32.totalorder %s30, 1
    %p326 = por %p324, %p325
    %p328 = scmp.ne.s32.totalorder %s313, %s327
    %p329 = scmp.eq.s32.totalorder %s30, 0
    %p330 = por %p328, %p329
    %s332 = sadd.s32 %s331, 1
    %p335 = scmp.eq.s32.totalorder %s24, 1
    %p336 = scmp.ne.s32.totalorder %s331, %s333
    %p337 = scmp.eq.s32.totalorder %s24, 0
    %p338 = por %p336, %p337
    %p339 = scmp.ne.s32.totalorder %s331, %s333
    %p340 = scmp.eq.s32.totalorder %s29, 1
    %p341 = por %p339, %p340
    %p342 = scmp.ne.s32.totalorder %s333, %s334
    %p343 = scmp.eq.s32.totalorder %s29, 0
    %p344 = por %p342, %p343
    %p345 = scmp.ne.s32.totalorder %s333, %s334
    %p346 = scmp.eq.s32.totalorder %s30, 1
    %p347 = por %p345, %p346
    %p349 = scmp.ne.s32.totalorder %s334, %s348
    %p350 = scmp.eq.s32.totalorder %s30, 0
    %p351 = por %p349, %p350
    %s353 = sadd.s32 %s352, 1
    %p356 = scmp.eq.s32.totalorder %s24, 1
    %p357 = scmp.ne.s32.totalorder %s352, %s354
    %p358 = scmp.eq.s32.totalorder %s24, 0
    %p359 = por %p357, %p358
    %p360 = scmp.ne.s32.totalorder %s352, %s354
    %p361 = scmp.eq.s32.totalorder %s29, 1
    %p362 = por %p360, %p361
    %p363 = scmp.ne.s32.totalorder %s354, %s355
    %p364 = scmp.eq.s32.totalorder %s29, 0
    %p365 = por %p363, %p364
    %p366 = scmp.ne.s32.totalorder %s354, %s355
    %p367 = scmp.eq.s32.totalorder %s30, 1
    %p368 = por %p366, %p367
    %p370 = scmp.ne.s32.totalorder %s355, %s369
    %p371 = scmp.eq.s32.totalorder %s30, 0
    %p372 = por %p370, %p371
    %s374 = sadd.s32 %s373, 1
    %p377 = scmp.eq.s32.totalorder %s24, 1
    %p378 = scmp.ne.s32.totalorder %s373, %s375
    %p379 = scmp.eq.s32.totalorder %s24, 0
    %p380 = por %p378, %p379
    %p381 = scmp.ne.s32.totalorder %s373, %s375
    %p382 = scmp.eq.s32.totalorder %s29, 1
    %p383 = por %p381, %p382
    %p384 = scmp.ne.s32.totalorder %s375, %s376
    %p385 = scmp.eq.s32.totalorder %s29, 0
    %p386 = por %p384, %p385
    %p387 = scmp.ne.s32.totalorder %s375, %s376
    %p388 = scmp.eq.s32.totalorder %s30, 1
    %p389 = por %p387, %p388
    %p391 = scmp.ne.s32.totalorder %s376, %s390
    %p392 = scmp.eq.s32.totalorder %s30, 0
    %p393 = por %p391, %p392
    %s395 = sadd.s32 %s394, 1
    %p398 = scmp.eq.s32.totalorder %s24, 1
    %p399 = scmp.ne.s32.totalorder %s394, %s396
    %p400 = scmp.eq.s32.totalorder %s24, 0
    %p401 = por %p399, %p400
    %p402 = scmp.ne.s32.totalorder %s394, %s396
    %p403 = scmp.eq.s32.totalorder %s29, 1
    %p404 = por %p402, %p403
    %p405 = scmp.ne.s32.totalorder %s396, %s397
    %p406 = scmp.eq.s32.totalorder %s29, 0
    %p407 = por %p405, %p406
    %p408 = scmp.ne.s32.totalorder %s396, %s397
    %p409 = scmp.eq.s32.totalorder %s30, 1
    %p410 = por %p408, %p409
    %p412 = scmp.ne.s32.totalorder %s397, %s411
    %p413 = scmp.eq.s32.totalorder %s30, 0
    %p414 = por %p412, %p413
    %s415 = ssub.s32 %s24, %s31
    %p416 = scmp.eq.s32.totalorder %s415, 0
    %s418 = sadd.s32 %s417, 1
    %s419 = scalar_select %p416, %s417, %s418
    %p422 = pneg %p416
    %p423 = scmp.eq.s32.totalorder %s24, 1
    %p424 = por %p422, %p423
    %p425 = scmp.ne.s32.totalorder %s417, %s420
    %p426 = scmp.eq.s32.totalorder %s24, 0
    %p427 = por %p425, %p426
    %p428 = scmp.ne.s32.totalorder %s417, %s420
    %p429 = scmp.eq.s32.totalorder %s29, 1
    %p430 = por %p428, %p429
    %p431 = scmp.ne.s32.totalorder %s420, %s421
    %p432 = scmp.eq.s32.totalorder %s29, 0
    %p433 = por %p431, %p432
    %p434 = scmp.ne.s32.totalorder %s420, %s421
    %p435 = scmp.eq.s32.totalorder %s30, 1
    %p436 = por %p434, %p435
    %p438 = scmp.ne.s32.totalorder %s421, %s437
    %p439 = scmp.eq.s32.totalorder %s30, 0
    %p440 = por %p438, %p439
    %p441 = scmp.le.s32.totalorder 1, %s24
    %p442 = scmp.lt.s32.totalorder %s24, 3
    %p443 = pnand %p441, %p442
    %p444 = pneg %p443
    // Predicated region
    $region9: #{symmetric_forward.1} parent=5 // pred_check
      _
    $region10: #{symmetric_forward.1} parent=5 // pred_check_branch
      %446 = sbr.rel (%p443) target = $region12
    $region11: #{symmetric_forward.1} parent=5 // pred_region
      %s447 = ssub.s32 %s24, 1
      // Predicated region
      $region13: #{symmetric_forward.1} parent=11 // pred_check
        %p448 = pneg %p71
      $region14: #{symmetric_forward.1} parent=11 // pred_check_branch
        %450 = sbr.rel (%p448) target = $region16
      $region15: #{symmetric_forward.1} parent=11 // pred_region
        _
      $region16: #{symmetric_forward.1} parent=11 // pred_fallthru
        _
      // Predicated region
      $region17: #{symmetric_forward.1} parent=11 // pred_check
        %p451 = pneg %p92
      $region18: #{symmetric_forward.1} parent=11 // pred_check_branch
        %453 = sbr.rel (%p451) target = $region20
      $region19: #{symmetric_forward.1} parent=11 // pred_region
        _
      $region20: #{symmetric_forward.1} parent=11 // pred_fallthru
        _
      // Predicated region
      $region21: #{symmetric_forward.1} parent=11 // pred_check
        %p454 = pneg %p113
      $region22: #{symmetric_forward.1} parent=11 // pred_check_branch
        %456 = sbr.rel (%p454) target = $region24
      $region23: #{symmetric_forward.1} parent=11 // pred_region
        _
      $region24: #{symmetric_forward.1} parent=11 // pred_fallthru
        _
      // Predicated region
      $region25: #{symmetric_forward.1} parent=11 // pred_check
        %p457 = pneg %p134
      $region26: #{symmetric_forward.1} parent=11 // pred_check_branch
        %459 = sbr.rel (%p457) target = $region28
      $region27: #{symmetric_forward.1} parent=11 // pred_region
        _
      $region28: #{symmetric_forward.1} parent=11 // pred_fallthru
        _
      // Predicated region
      $region29: #{symmetric_forward.1} parent=11 // pred_check
        %p460 = pneg %p155
      $region30: #{symmetric_forward.1} parent=11 // pred_check_branch
        %462 = sbr.rel (%p460) target = $region32
      $region31: #{symmetric_forward.1} parent=11 // pred_region
        _
      $region32: #{symmetric_forward.1} parent=11 // pred_fallthru
        _
      // Predicated region
      $region33: #{symmetric_forward.1} parent=11 // pred_check
        %p463 = pneg %p176
      $region34: #{symmetric_forward.1} parent=11 // pred_check_branch
        %465 = sbr.rel (%p463) target = $region36
      $region35: #{symmetric_forward.1} parent=11 // pred_region
        _
      $region36: #{symmetric_forward.1} parent=11 // pred_fallthru
        _
      // Predicated region
      $region37: #{symmetric_forward.1} parent=11 // pred_check
        %p466 = pneg %p197
      $region38: #{symmetric_forward.1} parent=11 // pred_check_branch
        %468 = sbr.rel (%p466) target = $region40
      $region39: #{symmetric_forward.1} parent=11 // pred_region
        _
      $region40: #{symmetric_forward.1} parent=11 // pred_fallthru
        _
      // Predicated region
      $region41: #{symmetric_forward.1} parent=11 // pred_check
        %p469 = pneg %p218
      $region42: #{symmetric_forward.1} parent=11 // pred_check_branch
        %471 = sbr.rel (%p469) target = $region44
      $region43: #{symmetric_forward.1} parent=11 // pred_region
        _
      $region44: #{symmetric_forward.1} parent=11 // pred_fallthru
        _
      // Predicated region
      $region45: #{symmetric_forward.1} parent=11 // pred_check
        %p472 = pneg %p239
      $region46: #{symmetric_forward.1} parent=11 // pred_check_branch
        %474 = sbr.rel (%p472) target = $region48
      $region47: #{symmetric_forward.1} parent=11 // pred_region
        _
      $region48: #{symmetric_forward.1} parent=11 // pred_fallthru
        _
      // Predicated region
      $region49: #{symmetric_forward.1} parent=11 // pred_check
        %p475 = pneg %p260
      $region50: #{symmetric_forward.1} parent=11 // pred_check_branch
        %477 = sbr.rel (%p475) target = $region52
      $region51: #{symmetric_forward.1} parent=11 // pred_region
        _
      $region52: #{symmetric_forward.1} parent=11 // pred_fallthru
        _
      // Predicated region
      $region53: #{symmetric_forward.1} parent=11 // pred_check
        %p478 = pneg %p281
      $region54: #{symmetric_forward.1} parent=11 // pred_check_branch
        %480 = sbr.rel (%p478) target = $region56
      $region55: #{symmetric_forward.1} parent=11 // pred_region
        _
      $region56: #{symmetric_forward.1} parent=11 // pred_fallthru
        _
      // Predicated region
      $region57: #{symmetric_forward.1} parent=11 // pred_check
        %p481 = pneg %p302
      $region58: #{symmetric_forward.1} parent=11 // pred_check_branch
        %483 = sbr.rel (%p481) target = $region60
      $region59: #{symmetric_forward.1} parent=11 // pred_region
        _
      $region60: #{symmetric_forward.1} parent=11 // pred_fallthru
        _
      // Predicated region
      $region61: #{symmetric_forward.1} parent=11 // pred_check
        %p484 = pneg %p323
      $region62: #{symmetric_forward.1} parent=11 // pred_check_branch
        %486 = sbr.rel (%p484) target = $region64
      $region63: #{symmetric_forward.1} parent=11 // pred_region
        _
      $region64: #{symmetric_forward.1} parent=11 // pred_fallthru
        _
      // Predicated region
      $region65: #{symmetric_forward.1} parent=11 // pred_check
        %p487 = pneg %p344
      $region66: #{symmetric_forward.1} parent=11 // pred_check_branch
        %489 = sbr.rel (%p487) target = $region68
      $region67: #{symmetric_forward.1} parent=11 // pred_region
        _
      $region68: #{symmetric_forward.1} parent=11 // pred_fallthru
        _
      // Predicated region
      $region69: #{symmetric_forward.1} parent=11 // pred_check
        %p490 = pneg %p365
      $region70: #{symmetric_forward.1} parent=11 // pred_check_branch
        %492 = sbr.rel (%p490) target = $region72
      $region71: #{symmetric_forward.1} parent=11 // pred_region
        _
      $region72: #{symmetric_forward.1} parent=11 // pred_fallthru
        _
      // Predicated region
      $region73: #{symmetric_forward.1} parent=11 // pred_check
        %p493 = pneg %p386
      $region74: #{symmetric_forward.1} parent=11 // pred_check_branch
        %495 = sbr.rel (%p493) target = $region76
      $region75: #{symmetric_forward.1} parent=11 // pred_region
        _
      $region76: #{symmetric_forward.1} parent=11 // pred_fallthru
        _
      // Predicated region
      $region77: #{symmetric_forward.1} parent=11 // pred_check
        %p496 = pneg %p407
      $region78: #{symmetric_forward.1} parent=11 // pred_check_branch
        %498 = sbr.rel (%p496) target = $region80
      $region79: #{symmetric_forward.1} parent=11 // pred_region
        _
      $region80: #{symmetric_forward.1} parent=11 // pred_fallthru
        _
    $region12: #{symmetric_forward.1} parent=5 // pred_fallthru
      _
    %p499 = scmp.lt.s32.totalorder %s24, 2
    // Predicated region
    $region81: #{symmetric_forward.1} parent=5 // pred_check
      %p500 = pneg %p499
    $region82: #{symmetric_forward.1} parent=5 // pred_check_branch
      %502 = sbr.rel (%p500) target = $region84
    $region83: #{symmetric_forward.1} parent=5 // pred_region
      // Predicated region
      $region85: #{symmetric_forward.1} parent=83 // pred_check
        %p503 = pneg %p44
      $region86: #{symmetric_forward.1} parent=83 // pred_check_branch
        %505 = sbr.rel (%p503) target = $region88
      $region87: #{symmetric_forward.1} parent=83 // pred_region
        %p506 = scmp.lt.s32.totalorder %s24, 1
        %s507 = scalar_select %p506, %s24, 1
        %s508 = smul.addr %s507, 24
        %s509 = smul.addr %s508, 8
        %s510 = scalar_lea.vmem %s0, %s509
      $region88: #{symmetric_forward.1} parent=83 // pred_fallthru
        _
    $region84: #{symmetric_forward.1} parent=5 // pred_fallthru
      _
    %p511 = scmp.le.s32.totalorder 1, %s24
    %p512 = scmp.lt.s32.totalorder %s24, 3
    %p513 = pnand %p511, %p512
    %p514 = pneg %p513
    // Predicated region
    $region89: #{symmetric_forward.1} parent=5 // pred_check
      _
    $region90: #{symmetric_forward.1} parent=5 // pred_check_branch
      %516 = sbr.rel (%p513) target = $region92
    $region91: #{symmetric_forward.1} parent=5 // pred_region
      %s517 = ssub.s32 %s24, 1
      %p518 = scmp.lt.s32.totalorder %s29, 1
      %s519 = scalar_select %p518, %s29, 1
      %s520 = smul.addr %s519, 24
      %s521 = smul.addr %s520, 8
      %s522 = scalar_lea.vmem %s0, %s521
      %p523 = pneg %p50
      %p524 = pneg %p47
      %p525 = pneg %p71
      %p526 = pneg %p68
      %p527 = pneg %p92
      %p528 = pneg %p89
      %p529 = pneg %p113
      %p530 = pneg %p110
      %p531 = pneg %p134
      %p532 = pneg %p131
      %p533 = pneg %p155
      %p534 = pneg %p152
      %p535 = pneg %p176
      %p536 = pneg %p173
      %p537 = pneg %p197
      %p538 = pneg %p194
      %p539 = pneg %p218
      %p540 = pneg %p215
      %p541 = pneg %p239
      %p542 = pneg %p236
      %p543 = pneg %p260
      %p544 = pneg %p257
      %p545 = pneg %p281
      %p546 = pneg %p278
      %p547 = pneg %p302
      %p548 = pneg %p299
      %p549 = pneg %p323
      %p550 = pneg %p320
      %p551 = pneg %p344
      %p552 = pneg %p341
      %p553 = pneg %p365
      %p554 = pneg %p362
      %p555 = pneg %p386
      %p556 = pneg %p383
      %p557 = pneg %p407
      %p558 = pneg %p404
      %p559 = pneg %p433
      %p560 = pneg %p430
      %p561 = scmp.lt.s32.totalorder %s29, 1
      %s562 = scalar_select %p561, %s29, 1
      %s563 = smul.addr %s562, 8
      %s564 = smul.addr %s563, 8
      %s565 = scalar_lea.vmem %s18, %s564
      %p566 = scmp.lt.s32.totalorder %s29, 1
      %s567 = scalar_select %p566, %s29, 1
      %s568 = smul.addr %s567, 24
      %s569 = smul.addr %s568, 8
      %s570 = scalar_lea.vmem %s0, %s569
      %p571 = scmp.lt.s32.totalorder %s29, 1
      %s572 = scalar_select %p571, %s29, 1
      %s573 = smul.addr %s572, 8
      %s574 = smul.addr %s573, 8
      %s575 = scalar_lea.vmem %s18, %s574
      %v576 = vld [vmem:[%s1] sm:$0x1]
      %577 = vst [vmem:[#allocation2] sm:$0xff] 0.0
      %578 = vst [vmem:[#allocation2 + $0x10] sm:$0xff] 0.0
      %579 = vst [vmem:[#allocation3] sm:$0xff] 0.0
      %580 = vst [vmem:[#allocation3 + $0x18] sm:$0xff] 0.0
      %581 = vst [vmem:[#allocation3 + $0x30] sm:$0xff] 0.0
      %582 = vst [vmem:[#allocation3 + $0x48] sm:$0xff] 0.0
      %583 = vst [vmem:[#allocation3 + $0x10] sm:$0xff] 0.0
      %584 = vst [vmem:[#allocation3 + $0x28] sm:$0xff] 0.0
      %585 = vst [vmem:[#allocation3 + $0x40] sm:$0xff] 0.0
      %586 = vst [vmem:[#allocation3 + $0x58] sm:$0xff] 0.0
      %v587 = vld [vmem:[%s570 + $0x90] sm:$0xff]
      %v588 = vld [vmem:[%s570 + $0x98] sm:$0xff]
      %v589 = vld [vmem:[%s570 + $0xa8] sm:$0xff]
      %v590 = vld [vmem:[%s570 + $0xb0] sm:$0xff]
      %595 = vrot.lane.b32.xlu0 %v587, 10
      %v596 = vpop.permute.xlu0 %595
      %597 = vrot.lane.b32.xlu0 %v588, 10
      %v598 = vpop.permute.xlu0 %597
      %599 = vrot.lane.b32.xlu0 %v589, 10
      %v600 = vpop.permute.xlu0 %599
      %601 = vrot.lane.b32.xlu0 %v590, 10
      %v602 = vpop.permute.xlu0 %601
      %vm603 = vcmask 80896
      %v604 = vsel %vm603, %v596, %v598
      %v605 = vsel %vm603, %v600, %v602
      %608 = vst [vmem:[#allocation4] sm:$0xff] %v604
      %609 = vst [vmem:[#allocation4 + $0x8] sm:$0xff] %v605
      %v610 = vld [vmem:[%s570 + $0x60] sm:$0xff]
      %v611 = vld [vmem:[%s570 + $0x68] sm:$0xff]
      %v612 = vld [vmem:[%s570 + $0x78] sm:$0xff]
      %v613 = vld [vmem:[%s570 + $0x80] sm:$0xff]
      %618 = vrot.lane.b32.xlu0 %v610, 9
      %v619 = vpop.permute.xlu0 %618
      %620 = vrot.lane.b32.xlu0 %v611, 9
      %v621 = vpop.permute.xlu0 %620
      %622 = vrot.lane.b32.xlu0 %v612, 9
      %v623 = vpop.permute.xlu0 %622
      %624 = vrot.lane.b32.xlu0 %v613, 9
      %v625 = vpop.permute.xlu0 %624
      %vm626 = vcmask 72704
      %v627 = vsel %vm626, %v619, %v621
      %v628 = vsel %vm626, %v623, %v625
      %631 = vst [vmem:[#allocation4 + $0x10] sm:$0xff] %v627
      %632 = vst [vmem:[#allocation4 + $0x18] sm:$0xff] %v628
      %v633 = vld [vmem:[%s570 + $0x90] sm:$0xff]
      %v634 = vld [vmem:[%s570 + $0x98] sm:$0xff]
      %v635 = vld [vmem:[%s570 + $0xa8] sm:$0xff]
      %v636 = vld [vmem:[%s570 + $0xb0] sm:$0xff]
      %641 = vrot.lane.b32.xlu0 %v633, 9
      %v642 = vpop.permute.xlu0 %641
      %643 = vrot.lane.b32.xlu0 %v634, 9
      %v644 = vpop.permute.xlu0 %643
      %645 = vrot.lane.b32.xlu0 %v635, 9
      %v646 = vpop.permute.xlu0 %645
      %647 = vrot.lane.b32.xlu0 %v636, 9
      %v648 = vpop.permute.xlu0 %647
      %v649 = vsel %vm626, %v642, %v644
      %v650 = vsel %vm626, %v646, %v648
      %653 = vst [vmem:[#allocation4 + $0x20] sm:$0xff] %v649
      %654 = vst [vmem:[#allocation4 + $0x28] sm:$0xff] %v650
      %v655 = vld [vmem:[%s570 + $0x30] sm:$0xff]
      %v656 = vld [vmem:[%s570 + $0x38] sm:$0xff]
      %v657 = vld [vmem:[%s570 + $0x48] sm:$0xff]
      %v658 = vld [vmem:[%s570 + $0x50] sm:$0xff]
      %663 = vrot.lane.b32.xlu0 %v655, 1
      %v664 = vpop.permute.xlu0 %663
      %665 = vrot.lane.b32.xlu0 %v656, 1
      %v666 = vpop.permute.xlu0 %665
      %667 = vrot.lane.b32.xlu0 %v657, 1
      %v668 = vpop.permute.xlu0 %667
      %669 = vrot.lane.b32.xlu0 %v658, 1
      %v670 = vpop.permute.xlu0 %669
      %vm671 = vcmask 7168
      %v672 = vsel %vm671, %v664, %v666
      %v673 = vsel %vm671, %v668, %v670
      %676 = vst [vmem:[#allocation4 + $0x30] sm:$0xff] %v672
      %677 = vst [vmem:[#allocation4 + $0x38] sm:$0xff] %v673
      %v678 = vld [vmem:[%s570 + $0x8] sm:$0xff]
      %v679 = vld [vmem:[%s570 + $0x20] sm:$0xff]
      %680 = vst [vmem:[#allocation4 + $0x40] sm:$0xff] %v678
      %681 = vst [vmem:[#allocation4 + $0x48] sm:$0xff] %v679
      %v682 = vld [vmem:[%s570 + $0x38] sm:$0xff]
      %v683 = vld [vmem:[%s570 + $0x50] sm:$0xff]
      %684 = vst [vmem:[#allocation4 + $0x50] sm:$0xff] %v682
      %685 = vst [vmem:[#allocation4 + $0x58] sm:$0xff] %v683
      %v686 = vld [vmem:[%s570 + $0x90] sm:$0xff]
      %v687 = vld [vmem:[%s570 + $0x98] sm:$0xff]
      %v688 = vld [vmem:[%s570 + $0xa8] sm:$0xff]
      %v689 = vld [vmem:[%s570 + $0xb0] sm:$0xff]
      %694 = vrot.lane.b32.xlu0 %v686, 1
      %v695 = vpop.permute.xlu0 %694
      %696 = vrot.lane.b32.xlu0 %v687, 1
      %v697 = vpop.permute.xlu0 %696
      %698 = vrot.lane.b32.xlu0 %v688, 1
      %v699 = vpop.permute.xlu0 %698
      %700 = vrot.lane.b32.xlu0 %v689, 1
      %v701 = vpop.permute.xlu0 %700
      %v702 = vsel %vm671, %v695, %v697
      %v703 = vsel %vm671, %v699, %v701
      %706 = vst [vmem:[#allocation4 + $0x60] sm:$0xff] %v702
      %707 = vst [vmem:[#allocation4 + $0x68] sm:$0xff] %v703
      %v708 = vld [vmem:[%s570 + $0x68] sm:$0xff]
      %v709 = vld [vmem:[%s570 + $0x80] sm:$0xff]
      %710 = vst [vmem:[#allocation4 + $0x70] sm:$0xff] %v708
      %711 = vst [vmem:[#allocation4 + $0x78] sm:$0xff] %v709
      %v712 = vld [vmem:[%s570 + $0x98] sm:$0xff]
      %v713 = vld [vmem:[%s570 + $0xb0] sm:$0xff]
      %714 = vst [vmem:[#allocation4 + $0x80] sm:$0xff] %v712
      %715 = vst [vmem:[#allocation4 + $0x88] sm:$0xff] %v713
      %v716 = vld [vmem:[%s2] sm:$0xff]
      %v717 = vld [vmem:[%s2 + $0x8] sm:$0xff]
      %v718 = vld [vmem:[#allocation4] sm:$0xff]
      %v719 = vld [vmem:[#allocation4 + $0x8] sm:$0xff]
      %v720 = vld [vmem:[#allocation4 + $0x10] sm:$0xff]
      %v721 = vld [vmem:[#allocation4 + $0x18] sm:$0xff]
      %v722 = vld [vmem:[#allocation4 + $0x20] sm:$0xff]
      %v723 = vld [vmem:[#allocation4 + $0x28] sm:$0xff]
      %v724 = vld [vmem:[#allocation4 + $0x30] sm:$0xff]
      %v725 = vld [vmem:[#allocation4 + $0x38] sm:$0xff]
      %v726 = vld [vmem:[#allocation4 + $0x40] sm:$0xff]
      %v727 = vld [vmem:[#allocation4 + $0x48] sm:$0xff]
      %v728 = vld [vmem:[#allocation4 + $0x50] sm:$0xff]
      %v729 = vld [vmem:[#allocation4 + $0x58] sm:$0xff]
      %v730 = vld [vmem:[#allocation4 + $0x60] sm:$0xff]
      %v731 = vld [vmem:[#allocation4 + $0x68] sm:$0xff]
      %v732 = vld [vmem:[#allocation4 + $0x70] sm:$0xff]
      %v733 = vld [vmem:[#allocation4 + $0x78] sm:$0xff]
      %v734 = vld [vmem:[#allocation4 + $0x80] sm:$0xff]
      %v735 = vld [vmem:[#allocation4 + $0x88] sm:$0xff]
      %v736 = vld [vmem:[%s3] sm:$0xff]
      %738 = vset.pattern.permute.xlu0 0
      %739 = vperm.xlu0 %738, %v736
      %v740 = vpop.permute.xlu0 %739
      %vm742 = vcmask 130048
      %v744 = vsel %vm742, %v717, 0
      %746 = vmatprep.subr.mxu0 0.0
      %747 = vmatpush1.msra.mxu0 %v733
      %748 = vmatprep.subr.mxu0 0.0
      %749 = vmatpush1.msra.mxu0 %v732
      %750 = vmatprep.subr.mxu0 0.0
      %751 = vmatpush1.msra.mxu0 %v731
      %752 = vmatprep.subr.mxu0 0.0
      %753 = vmatpush1.msra.mxu0 %v730
      %754 = vmatprep.subr.mxu0 0.0
      %755 = vmatpush1.msra.mxu0 %v729
      %756 = vmatprep.subr.mxu0 0.0
      %757 = vmatpush1.msra.mxu0 %v728
      %758 = vmatprep.subr.mxu0 0.0
      %759 = vmatpush1.msra.mxu0 %v727
      %760 = vmatprep.subr.mxu0 0.0
      %761 = vmatpush1.msra.mxu0 %v726
      %762 = vmatprep.subr.mxu0 0.0
      %763 = vmatpush1.msra.mxu0 %v725
      %764 = vmatprep.subr.mxu0 0.0
      %765 = vmatpush1.msra.mxu0 %v724
      %766 = vmatprep.subr.mxu0 0.0
      %767 = vmatpush1.msra.mxu0 %v723
      %768 = vmatprep.subr.mxu0 0.0
      %769 = vmatpush1.msra.mxu0 %v722
      %770 = vmatprep.subr.mxu0 0.0
      %771 = vmatpush1.msra.mxu0 %v721
      %772 = vmatprep.subr.mxu0 0.0
      %773 = vmatpush1.msra.mxu0 %v720
      %774 = vmatprep.subr.mxu0 0.0
      %775 = vmatpush1.msra.mxu0 %v719
      %776 = vmatprep.subr.mxu0 0.0
      %777 = vmatpush1.msra.mxu0 %v718
      %778 = vmatprep.subr.mxu0 0.0
      %779 = vmatpush2.msra.mxu0 0.0
      %780 = vmatprep.subr.mxu0 0.0
      %781 = vmatpush2.msra.mxu0 0.0
      %782 = vmatprep.subr.mxu0 0.0
      %783 = vmatpush2.msra.mxu0 0.0
      %784 = vmatprep.subr.mxu0 0.0
      %785 = vmatpush2.msra.mxu0 0.0
      %786 = vmatprep.subr.mxu0 0.0
      %787 = vmatpush2.msra.mxu0 0.0
      %788 = vmatprep.subr.mxu0 0.0
      %789 = vmatpush2.msra.mxu0 0.0
      %790 = vmatprep.subr.mxu0 0.0
      %791 = vmatpush2.msra.mxu0 0.0
      %792 = vmatprep.subr.mxu0 0.0
      %793 = vmatpush2.msra.mxu0 0.0
      %794 = vmatprep.subr.mxu0 0.0
      %795 = vmatpush2.msra.mxu0 0.0
      %796 = vmatprep.subr.mxu0 0.0
      %797 = vmatpush2.msra.mxu0 0.0
      %798 = vmatprep.subr.mxu0 0.0
      %799 = vmatpush2.msra.mxu0 0.0
      %800 = vmatprep.subr.mxu0 0.0
      %801 = vmatpush2.msra.mxu0 0.0
      %802 = vmatprep.subr.mxu0 0.0
      %803 = vmatpush2.msra.mxu0 0.0
      %804 = vmatprep.subr.mxu0 0.0
      %805 = vmatpush2.msra.mxu0 0.0
      %806 = vmatprep.subr.mxu0 0.0
      %807 = vmatpush2.msra.mxu0 %v735
      %808 = vmatprep.subr.mxu0 0.0
      %809 = vmatpush2.msra.mxu0 %v734
      %810 = vmatprep.mubr.f32.mxu0 %v744
      %811 = vmatmul.mubr.f32.gmra.mxu0 %v716
      %v812 = vpop.f32.mrf.mxu0
      %v813 = vadd.f32 %v740, %v812
      %v814 = vpop.f32.mrf.mxu0
      %815 = vdwg.mxu0
      %v816 = vmin.f32 %v813, 20.0
      %v817 = vmul.f32 %v816, 1.442695
      %v818 = vpow.pop %v817
      %v819 = vadd.f32 %v818, 2.0
      %v820 = vmul.f32 %v818, %v819
      %v821 = vmul.f32 %v813, %v820
      %v822 = vadd.f32 %v820, 2.0
      %v823 = vrcp.pop %v822
      %v824 = vmul.f32 %v821, %v823
      %v826 = vlaneseq
      %v827 = vshrl.u32 %v826, 7
      %v828 = vsub.s32 0, %v827
      %v829 = vrot.slane %v576, %v828
      %v831 = vmul.f32 %v824, %v829
      %832 = vadd.xlane.f32.xlu0 %v831
      %v833 = vpop.xlane.xlu0 %832
      %v834 = vmul.f32 %v833, 0.015625
      %v835 = vld [vmem:[%s10] sm:$0xff]
      %v836 = vmul.f32 %v835, %v834
      %vm837 = vcmask 15360
      %v838 = vsel %vm837, %v836, 0.0
      %v839 = vrot.slane %v838, 4
      %v840 = vadd.f32 %v838, %v839
      %v841 = vrot.slane %v840, 2
      %v842 = vadd.f32 %v840, %v841
      %v843 = vrot.slane %v842, 1
      %v844 = vadd.f32 %v842, %v843
      %v845 = vld [vmem:[%s11] sm:$0x1]
      %v846 = vadd.f32 %v844, %v845
      %v847 = vmax.f32 %v846, 0.0
      %v848 = vld [vmem:[%s12] sm:$0xff]
      %v849 = vlaneseq
      %v850 = vshrl.u32 %v849, 7
      %v851 = vsub.s32 0, %v850
      %v852 = vrot.slane %v847, %v851
      %v853 = vmul.f32 %v848, %v852
      %v854 = vsel %vm837, %v853, 0.0
      %855 = vadd.xlane.f32.xlu0 %v854
      %v856 = vpop.xlane.xlu0 %855
      %v857 = vld [vmem:[%s13] sm:$0xff]
      %v858 = vadd.f32 %v856, %v857
      %v859 = vxor.u32 %v858, 2147483648
      %v860 = vmul.f32 %v859, 1.442695
      %v861 = vpow.pop %v860
      %v862 = vadd.f32 %v861, 1.0
      %v863 = vrcp.pop %v862
      %v864 = vmul.f32 1.0, %v863
      %866 = vset.pattern.permute.xlu0 0
      %867 = vperm.xlu0 %866, %v864
      %v868 = vpop.permute.xlu0 %867
      %v870 = vmul.f32 %v831, %v868
      %871 = vst [vmem:[#allocation2 + $0x8] sm:$0xff] %v870
      %v872 = vld [vmem:[#allocation2] sm:$0xff]
      %v873 = vld [vmem:[#allocation2 + $0x8] sm:$0xff]
      %876 = vrot.lane.b32.xlu0 %v872, 10
      %v877 = vpop.permute.xlu0 %876
      %878 = vrot.lane.b32.xlu0 %v873, 10
      %v879 = vpop.permute.xlu0 %878
      %v880 = vsel %vm603, %v877, %v879
      %882 = vst [vmem:[#allocation4] sm:$0xff] %v880
      %v883 = vld [vmem:[#allocation2] sm:$0xff]
      %v884 = vld [vmem:[#allocation2 + $0x8] sm:$0xff]
      %887 = vrot.lane.b32.xlu0 %v883, 9
      %v888 = vpop.permute.xlu0 %887
      %889 = vrot.lane.b32.xlu0 %v884, 9
      %v890 = vpop.permute.xlu0 %889
      %v891 = vsel %vm626, %v888, %v890
      %893 = vst [vmem:[#allocation4 + $0x8] sm:$0xff] %v891
      %v894 = vld [vmem:[#allocation2] sm:$0xff]
      %v895 = vld [vmem:[#allocation2 + $0x8] sm:$0xff]
      %898 = vrot.lane.b32.xlu0 %v894, 8
      %v899 = vpop.permute.xlu0 %898
      %900 = vrot.lane.b32.xlu0 %v895, 8
      %v901 = vpop.permute.xlu0 %900
      %vm902 = vcmask 64512
      %v903 = vsel %vm902, %v899, %v901
      %905 = vst [vmem:[#allocation4 + $0x10] sm:$0xff] %v903
      %v906 = vld [vmem:[#allocation2] sm:$0xff]
      %v907 = vld [vmem:[#allocation2 + $0x8] sm:$0xff]
      %910 = vrot.lane.b32.xlu0 %v906, 1
      %v911 = vpop.permute.xlu0 %910
      %912 = vrot.lane.b32.xlu0 %v907, 1
      %v913 = vpop.permute.xlu0 %912
      %v914 = vsel %vm671, %v911, %v913
      %916 = vst [vmem:[#allocation4 + $0x18] sm:$0xff] %v914
      %v917 = vld [vmem:[#allocation2 + $0x8] sm:$0xff]
      %918 = vst [vmem:[#allocation4 + $0x20] sm:$0xff] %v917
      %v919 = vld [vmem:[#allocation2 + $0x8] sm:$0xff]
      %v920 = vld [vmem:[#allocation2 + $0x10] sm:$0xff]
      %923 = vrot.lane.b32.xlu0 %v919, 127
      %v924 = vpop.permute.xlu0 %923
      %925 = vrot.lane.b32.xlu0 %v920, 127
      %v926 = vpop.permute.xlu0 %925
      %vm927 = vcmask 1039360
      %v928 = vsel %vm927, %v924, %v926
      %930 = vst [vmem:[#allocation4 + $0x28] sm:$0xff] %v928
      %v931 = vld [vmem:[#allocation2 + $0x8] sm:$0xff]
      %v932 = vld [vmem:[#allocation2 + $0x10] sm:$0xff]
      %935 = vrot.lane.b32.xlu0 %v931, 120
      %v936 = vpop.permute.xlu0 %935
      %937 = vrot.lane.b32.xlu0 %v932, 120
      %v938 = vpop.permute.xlu0 %937
      %vm939 = vcmask 982016
      %v940 = vsel %vm939, %v936, %v938
      %942 = vst [vmem:[#allocation4 + $0x30] sm:$0xff] %v940
      %v943 = vld [vmem:[#allocation2 + $0x8] sm:$0xff]
      %v944 = vld [vmem:[#allocation2 + $0x10] sm:$0xff]
      %947 = vrot.lane.b32.xlu0 %v943, 119
      %v948 = vpop.permute.xlu0 %947
      %949 = vrot.lane.b32.xlu0 %v944, 119
      %v950 = vpop.permute.xlu0 %949
      %vm951 = vcmask 973824
      %v952 = vsel %vm951, %v948, %v950
      %954 = vst [vmem:[#allocation4 + $0x38] sm:$0xff] %v952
      %v955 = vld [vmem:[#allocation2 + $0x8] sm:$0xff]
      %v956 = vld [vmem:[#allocation2 + $0x10] sm:$0xff]
      %959 = vrot.lane.b32.xlu0 %v955, 118
      %v960 = vpop.permute.xlu0 %959
      %961 = vrot.lane.b32.xlu0 %v956, 118
      %v962 = vpop.permute.xlu0 %961
      %vm963 = vcmask 965632
      %v964 = vsel %vm963, %v960, %v962
      %966 = vst [vmem:[#allocation4 + $0x40] sm:$0xff] %v964
      %v967 = vld [vmem:[%s4] sm:$0xff]
      %v968 = vld [vmem:[#allocation4] sm:$0xff]
      %v969 = vld [vmem:[#allocation4 + $0x8] sm:$0xff]
      %v970 = vld [vmem:[#allocation4 + $0x10] sm:$0xff]
      %v971 = vld [vmem:[#allocation4 + $0x18] sm:$0xff]
      %v972 = vld [vmem:[#allocation4 + $0x20] sm:$0xff]
      %v973 = vld [vmem:[#allocation4 + $0x28] sm:$0xff]
      %v974 = vld [vmem:[#allocation4 + $0x30] sm:$0xff]
      %v975 = vld [vmem:[#allocation4 + $0x38] sm:$0xff]
      %v976 = vld [vmem:[#allocation4 + $0x40] sm:$0xff]
      %v977 = vld [vmem:[%s5] sm:$0xff]
      %979 = vset.pattern.permute.xlu0 0
      %980 = vperm.xlu0 %979, %v977
      %v981 = vpop.permute.xlu0 %980
      %vm983 = vcmask 588800
      %v985 = vsel %vm983, %v967, 0
      %987 = vmatprep.subr.mxu0 0.0
      %988 = vmatpush1.msra.mxu0 0.0
      %989 = vmatprep.subr.mxu0 0.0
      %990 = vmatpush1.msra.mxu0 0.0
      %991 = vmatprep.subr.mxu0 0.0
      %992 = vmatpush1.msra.mxu0 0.0
      %993 = vmatprep.subr.mxu0 0.0
      %994 = vmatpush1.msra.mxu0 0.0
      %995 = vmatprep.subr.mxu0 0.0
      %996 = vmatpush1.msra.mxu0 0.0
      %997 = vmatprep.subr.mxu0 0.0
      %998 = vmatpush1.msra.mxu0 0.0
      %999 = vmatprep.subr.mxu0 0.0
      %1000 = vmatpush1.msra.mxu0 0.0
      %1001 = vmatprep.subr.mxu0 0.0
      %1002 = vmatpush1.msra.mxu0 %v976
      %1003 = vmatprep.subr.mxu0 0.0
      %1004 = vmatpush1.msra.mxu0 %v975
      %1005 = vmatprep.subr.mxu0 0.0
      %1006 = vmatpush1.msra.mxu0 %v974
      %1007 = vmatprep.subr.mxu0 0.0
      %1008 = vmatpush1.msra.mxu0 %v973
      %1009 = vmatprep.subr.mxu0 0.0
      %1010 = vmatpush1.msra.mxu0 %v972
      %1011 = vmatprep.subr.mxu0 0.0
      %1012 = vmatpush1.msra.mxu0 %v971
      %1013 = vmatprep.subr.mxu0 0.0
      %1014 = vmatpush1.msra.mxu0 %v970
      %1015 = vmatprep.subr.mxu0 0.0
      %1016 = vmatpush1.msra.mxu0 %v969
      %1017 = vmatprep.subr.mxu0 0.0
      %1018 = vmatpush1.msra.mxu0 %v968
      %1019 = vmatprep.subr.mxu0 0.0
      %1020 = vmatpush2.msra.mxu0 0.0
      %1021 = vmatprep.subr.mxu0 0.0
      %1022 = vmatpush2.msra.mxu0 0.0
      %1023 = vmatprep.subr.mxu0 0.0
      %1024 = vmatpush2.msra.mxu0 0.0
      %1025 = vmatprep.subr.mxu0 0.0
      %1026 = vmatpush2.msra.mxu0 0.0
      %1027 = vmatprep.subr.mxu0 0.0
      %1028 = vmatpush2.msra.mxu0 0.0
      %1029 = vmatprep.subr.mxu0 0.0
      %1030 = vmatpush2.msra.mxu0 0.0
      %1031 = vmatprep.subr.mxu0 0.0
      %1032 = vmatpush2.msra.mxu0 0.0
      %1033 = vmatprep.subr.mxu0 0.0
      %1034 = vmatpush2.msra.mxu0 0.0
      %1035 = vmatprep.subr.mxu0 0.0
      %1036 = vmatpush2.msra.mxu0 0.0
      %1037 = vmatprep.subr.mxu0 0.0
      %1038 = vmatpush2.msra.mxu0 0.0
      %1039 = vmatprep.subr.mxu0 0.0
      %1040 = vmatpush2.msra.mxu0 0.0
      %1041 = vmatprep.subr.mxu0 0.0
      %1042 = vmatpush2.msra.mxu0 0.0
      %1043 = vmatprep.subr.mxu0 0.0
      %1044 = vmatpush2.msra.mxu0 0.0
      %1045 = vmatprep.subr.mxu0 0.0
      %1046 = vmatpush2.msra.mxu0 0.0
      %1047 = vmatprep.subr.mxu0 0.0
      %1048 = vmatpush2.msra.mxu0 0.0
      %1049 = vmatprep.subr.mxu0 0.0
      %1050 = vmatpush2.msra.mxu0 0.0
      %1051 = vmatprep.mubr.f32.mxu0 0.0
      %1052 = vmatmul.mubr.f32.gmra.mxu0 %v985
      %v1053 = vpop.f32.mrf.mxu0
      %v1054 = vadd.f32 %v981, %v1053
      %v1055 = vpop.f32.mrf.mxu0
      %1056 = vdwg.mxu0
      %v1057 = vmul.f32 %v1054, %v829
      %1058 = vst [vmem:[#allocation2 + $0x8] sm:$0xff] %v1057
      %v1059 = vld [vmem:[#allocation2] sm:$0xff]
      %v1060 = vld [vmem:[#allocation2 + $0x8] sm:$0xff]
      %1063 = vrot.lane.b32.xlu0 %v1059, 10
      %v1064 = vpop.permute.xlu0 %1063
      %1065 = vrot.lane.b32.xlu0 %v1060, 10
      %v1066 = vpop.permute.xlu0 %1065
      %v1067 = vsel %vm603, %v1064, %v1066
      %1069 = vst [vmem:[#allocation4] sm:$0xff] %v1067
      %v1070 = vld [vmem:[#allocation2] sm:$0xff]
      %v1071 = vld [vmem:[#allocation2 + $0x8] sm:$0xff]
      %1074 = vrot.lane.b32.xlu0 %v1070, 9
      %v1075 = vpop.permute.xlu0 %1074
      %1076 = vrot.lane.b32.xlu0 %v1071, 9
      %v1077 = vpop.permute.xlu0 %1076
      %v1078 = vsel %vm626, %v1075, %v1077
      %1080 = vst [vmem:[#allocation4 + $0x8] sm:$0xff] %v1078
      %v1081 = vld [vmem:[#allocation2] sm:$0xff]
      %v1082 = vld [vmem:[#allocation2 + $0x8] sm:$0xff]
      %1085 = vrot.lane.b32.xlu0 %v1081, 8
      %v1086 = vpop.permute.xlu0 %1085
      %1087 = vrot.lane.b32.xlu0 %v1082, 8
      %v1088 = vpop.permute.xlu0 %1087
      %v1089 = vsel %vm902, %v1086, %v1088
      %1091 = vst [vmem:[#allocation4 + $0x10] sm:$0xff] %v1089
      %v1092 = vld [vmem:[#allocation2] sm:$0xff]
      %v1093 = vld [vmem:[#allocation2 + $0x8] sm:$0xff]
      %1096 = vrot.lane.b32.xlu0 %v1092, 1
      %v1097 = vpop.permute.xlu0 %1096
      %1098 = vrot.lane.b32.xlu0 %v1093, 1
      %v1099 = vpop.permute.xlu0 %1098
      %v1100 = vsel %vm671, %v1097, %v1099
      %1102 = vst [vmem:[#allocation4 + $0x18] sm:$0xff] %v1100
      %v1103 = vld [vmem:[#allocation2 + $0x8] sm:$0xff]
      %1104 = vst [vmem:[#allocation4 + $0x20] sm:$0xff] %v1103
      %v1105 = vld [vmem:[#allocation2 + $0x8] sm:$0xff]
      %v1106 = vld [vmem:[#allocation2 + $0x10] sm:$0xff]
      %1109 = vrot.lane.b32.xlu0 %v1105, 127
      %v1110 = vpop.permute.xlu0 %1109
      %1111 = vrot.lane.b32.xlu0 %v1106, 127
      %v1112 = vpop.permute.xlu0 %1111
      %v1113 = vsel %vm927, %v1110, %v1112
      %1115 = vst [vmem:[#allocation4 + $0x28] sm:$0xff] %v1113
      %v1116 = vld [vmem:[#allocation2 + $0x8] sm:$0xff]
      %v1117 = vld [vmem:[#allocation2 + $0x10] sm:$0xff]
      %1120 = vrot.lane.b32.xlu0 %v1116, 120
      %v1121 = vpop.permute.xlu0 %1120
      %1122 = vrot.lane.b32.xlu0 %v1117, 120
      %v1123 = vpop.permute.xlu0 %1122
      %v1124 = vsel %vm939, %v1121, %v1123
      %1126 = vst [vmem:[#allocation4 + $0x30] sm:$0xff] %v1124
      %v1127 = vld [vmem:[#allocation2 + $0x8] sm:$0xff]
      %v1128 = vld [vmem:[#allocation2 + $0x10] sm:$0xff]
      %1131 = vrot.lane.b32.xlu0 %v1127, 119
      %v1132 = vpop.permute.xlu0 %1131
      %1133 = vrot.lane.b32.xlu0 %v1128, 119
      %v1134 = vpop.permute.xlu0 %1133
      %v1135 = vsel %vm951, %v1132, %v1134
      %1137 = vst [vmem:[#allocation4 + $0x38] sm:$0xff] %v1135
      %v1138 = vld [vmem:[#allocation2 + $0x8] sm:$0xff]
      %v1139 = vld [vmem:[#allocation2 + $0x10] sm:$0xff]
      %1142 = vrot.lane.b32.xlu0 %v1138, 118
      %v1143 = vpop.permute.xlu0 %1142
      %1144 = vrot.lane.b32.xlu0 %v1139, 118
      %v1145 = vpop.permute.xlu0 %1144
      %v1146 = vsel %vm963, %v1143, %v1145
      %1148 = vst [vmem:[#allocation4 + $0x40] sm:$0xff] %v1146
      %v1149 = vld [vmem:[%s6] sm:$0xff]
      %v1150 = vld [vmem:[%s6 + $0x8] sm:$0xff]
      %v1151 = vld [vmem:[%s6 + $0x10] sm:$0xff]
      %v1152 = vld [vmem:[%s6 + $0x18] sm:$0xff]
      %v1153 = vld [vmem:[#allocation4] sm:$0xff]
      %v1154 = vld [vmem:[#allocation4 + $0x8] sm:$0xff]
      %v1155 = vld [vmem:[#allocation4 + $0x10] sm:$0xff]
      %v1156 = vld [vmem:[#allocation4 + $0x18] sm:$0xff]
      %v1157 = vld [vmem:[#allocation4 + $0x20] sm:$0xff]
      %v1158 = vld [vmem:[#allocation4 + $0x28] sm:$0xff]
      %v1159 = vld [vmem:[#allocation4 + $0x30] sm:$0xff]
      %v1160 = vld [vmem:[#allocation4 + $0x38] sm:$0xff]
      %v1161 = vld [vmem:[#allocation4 + $0x40] sm:$0xff]
      %v1162 = vld [vmem:[%s7] sm:$0xff]
      %v1163 = vld [vmem:[%s7 + $0x8] sm:$0xff]
      %v1164 = vld [vmem:[%s7 + $0x10] sm:$0xff]
      %v1165 = vld [vmem:[%s7 + $0x18] sm:$0xff]
      %1167 = vset.pattern.permute.xlu0 0
      %1168 = vperm.xlu0 %1167, %v1162
      %v1169 = vpop.permute.xlu0 %1168
      %1172 = vset.pattern.permute.xlu0 0
      %1173 = vperm.xlu0 %1172, %v1163
      %v1174 = vpop.permute.xlu0 %1173
      %1177 = vset.pattern.permute.xlu0 0
      %1178 = vperm.xlu0 %1177, %v1164
      %v1179 = vpop.permute.xlu0 %1178
      %1182 = vset.pattern.permute.xlu0 0
      %1183 = vperm.xlu0 %1182, %v1165
      %v1184 = vpop.permute.xlu0 %1183
      %v1187 = vsel %vm983, %v1149, 0
      %v1190 = vsel %vm983, %v1150, 0
      %v1193 = vsel %vm983, %v1151, 0
      %v1196 = vsel %vm983, %v1152, 0
      %1198 = vmatprep.subr.mxu0 0.0
      %1199 = vmatpush1.msra.mxu0 0.0
      %1200 = vmatprep.subr.mxu0 0.0
      %1201 = vmatpush1.msra.mxu0 0.0
      %1202 = vmatprep.subr.mxu0 0.0
      %1203 = vmatpush1.msra.mxu0 0.0
      %1204 = vmatprep.subr.mxu0 0.0
      %1205 = vmatpush1.msra.mxu0 0.0
      %1206 = vmatprep.subr.mxu0 0.0
      %1207 = vmatpush1.msra.mxu0 0.0
      %1208 = vmatprep.subr.mxu0 0.0
      %1209 = vmatpush1.msra.mxu0 0.0
      %1210 = vmatprep.subr.mxu0 0.0
      %1211 = vmatpush1.msra.mxu0 0.0
      %1212 = vmatprep.subr.mxu0 0.0
      %1213 = vmatpush1.msra.mxu0 %v1161
      %1214 = vmatprep.subr.mxu0 0.0
      %1215 = vmatpush1.msra.mxu0 %v1160
      %1216 = vmatprep.subr.mxu0 0.0
      %1217 = vmatpush1.msra.mxu0 %v1159
      %1218 = vmatprep.subr.mxu0 0.0
      %1219 = vmatpush1.msra.mxu0 %v1158
      %1220 = vmatprep.subr.mxu0 0.0
      %1221 = vmatpush1.msra.mxu0 %v1157
      %1222 = vmatprep.subr.mxu0 0.0
      %1223 = vmatpush1.msra.mxu0 %v1156
      %1224 = vmatprep.subr.mxu0 0.0
      %1225 = vmatpush1.msra.mxu0 %v1155
      %1226 = vmatprep.subr.mxu0 0.0
      %1227 = vmatpush1.msra.mxu0 %v1154
      %1228 = vmatprep.subr.mxu0 0.0
      %1229 = vmatpush1.msra.mxu0 %v1153
      %1230 = vmatprep.subr.mxu0 0.0
      %1231 = vmatpush2.msra.mxu0 0.0
      %1232 = vmatprep.subr.mxu0 0.0
      %1233 = vmatpush2.msra.mxu0 0.0
      %1234 = vmatprep.subr.mxu0 0.0
      %1235 = vmatpush2.msra.mxu0 0.0
      %1236 = vmatprep.subr.mxu0 0.0
      %1237 = vmatpush2.msra.mxu0 0.0
      %1238 = vmatprep.subr.mxu0 0.0
      %1239 = vmatpush2.msra.mxu0 0.0
      %1240 = vmatprep.subr.mxu0 0.0
      %1241 = vmatpush2.msra.mxu0 0.0
      %1242 = vmatprep.subr.mxu0 0.0
      %1243 = vmatpush2.msra.mxu0 0.0
      %1244 = vmatprep.subr.mxu0 0.0
      %1245 = vmatpush2.msra.mxu0 0.0
      %1246 = vmatprep.subr.mxu0 0.0
      %1247 = vmatpush2.msra.mxu0 0.0
      %1248 = vmatprep.subr.mxu0 0.0
      %1249 = vmatpush2.msra.mxu0 0.0
      %1250 = vmatprep.subr.mxu0 0.0
      %1251 = vmatpush2.msra.mxu0 0.0
      %1252 = vmatprep.subr.mxu0 0.0
      %1253 = vmatpush2.msra.mxu0 0.0
      %1254 = vmatprep.subr.mxu0 0.0
      %1255 = vmatpush2.msra.mxu0 0.0
      %1256 = vmatprep.subr.mxu0 0.0
      %1257 = vmatpush2.msra.mxu0 0.0
      %1258 = vmatprep.subr.mxu0 0.0
      %1259 = vmatpush2.msra.mxu0 0.0
      %1260 = vmatprep.subr.mxu0 0.0
      %1261 = vmatpush2.msra.mxu0 0.0
      %1262 = vmatprep.mubr.f32.mxu0 0.0
      %1263 = vmatmul.mubr.f32.gmra.mxu0 %v1187
      %v1264 = vpop.f32.mrf.mxu0
      %v1265 = vadd.f32 %v1169, %v1264
      %v1266 = vpop.f32.mrf.mxu0
      %1267 = vmatprep.mubr.f32.mxu0 0.0
      %1268 = vmatmul.mubr.f32.gmra.mxu0 %v1190
      %v1269 = vpop.f32.mrf.mxu0
      %v1270 = vadd.f32 %v1174, %v1269
      %v1271 = vpop.f32.mrf.mxu0
      %1272 = vmatprep.mubr.f32.mxu0 0.0
      %1273 = vmatmul.mubr.f32.gmra.mxu0 %v1193
      %v1274 = vpop.f32.mrf.mxu0
      %v1275 = vadd.f32 %v1179, %v1274
      %v1276 = vpop.f32.mrf.mxu0
      %1277 = vmatprep.mubr.f32.mxu0 0.0
      %1278 = vmatmul.mubr.f32.gmra.mxu0 %v1196
      %v1279 = vpop.f32.mrf.mxu0
      %v1280 = vadd.f32 %v1184, %v1279
      %v1281 = vpop.f32.mrf.mxu0
      %1282 = vdwg.mxu0
      %v1283 = vmin.f32 %v1265, 20.0
      %v1284 = vmin.f32 %v1270, 20.0
      %v1285 = vmin.f32 %v1275, 20.0
      %v1286 = vmin.f32 %v1280, 20.0
      %v1287 = vmul.f32 %v1283, 1.442695
      %v1288 = vpow.pop %v1287
      %v1289 = vmul.f32 %v1284, 1.442695
      %v1290 = vpow.pop %v1289
      %v1291 = vmul.f32 %v1285, 1.442695
      %v1292 = vpow.pop %v1291
      %v1293 = vmul.f32 %v1286, 1.442695
      %v1294 = vpow.pop %v1293
      %v1295 = vadd.f32 %v1288, 2.0
      %v1296 = vadd.f32 %v1290, 2.0
      %v1297 = vadd.f32 %v1292, 2.0
      %v1298 = vadd.f32 %v1294, 2.0
      %v1299 = vmul.f32 %v1288, %v1295
      %v1300 = vmul.f32 %v1290, %v1296
      %v1301 = vmul.f32 %v1292, %v1297
      %v1302 = vmul.f32 %v1294, %v1298
      %v1303 = vmul.f32 %v1265, %v1299
      %v1304 = vmul.f32 %v1270, %v1300
      %v1305 = vmul.f32 %v1275, %v1301
      %v1306 = vmul.f32 %v1280, %v1302
      %v1307 = vadd.f32 %v1299, 2.0
      %v1308 = vadd.f32 %v1300, 2.0
      %v1309 = vadd.f32 %v1301, 2.0
      %v1310 = vadd.f32 %v1302, 2.0
      %v1311 = vrcp.pop %v1307
      %v1312 = vrcp.pop %v1308
      %v1313 = vrcp.pop %v1309
      %v1314 = vrcp.pop %v1310
      %v1315 = vmul.f32 %v1303, %v1311
      %v1316 = vmul.f32 %v1304, %v1312
      %v1317 = vmul.f32 %v1305, %v1313
      %v1318 = vmul.f32 %v1306, %v1314
      %v1319 = vmul.f32 %v1315, %v829
      %v1320 = vmul.f32 %v1316, %v829
      %v1321 = vmul.f32 %v1317, %v829
      %v1322 = vmul.f32 %v1318, %v829
      %1323 = vadd.xlane.f32.xlu0 %v1319
      %v1324 = vpop.xlane.xlu0 %1323
      %1325 = vadd.xlane.f32.xlu0 %v1320
      %v1326 = vpop.xlane.xlu0 %1325
      %1327 = vadd.xlane.f32.xlu0 %v1321
      %v1328 = vpop.xlane.xlu0 %1327
      %1329 = vadd.xlane.f32.xlu0 %v1322
      %v1330 = vpop.xlane.xlu0 %1329
      %v1331 = vadd.f32 %v1324, %v1326
      %v1332 = vadd.f32 %v1331, %v1328
      %v1333 = vadd.f32 %v1332, %v1330
      %v1334 = vmul.f32 %v1333, 0.00390625
      %v1335 = vld [vmem:[%s14] sm:$0xff]
      %v1336 = vmul.f32 %v1335, %v1334
      %v1337 = vsel %vm837, %v1336, 0.0
      %v1338 = vrot.slane %v1337, 4
      %v1339 = vadd.f32 %v1337, %v1338
      %v1340 = vrot.slane %v1339, 2
      %v1341 = vadd.f32 %v1339, %v1340
      %v1342 = vrot.slane %v1341, 1
      %v1343 = vadd.f32 %v1341, %v1342
      %v1344 = vld [vmem:[%s15] sm:$0x1]
      %v1345 = vadd.f32 %v1343, %v1344
      %v1346 = vmax.f32 %v1345, 0.0
      %v1347 = vld [vmem:[%s16] sm:$0xff]
      %v1348 = vlaneseq
      %v1349 = vshrl.u32 %v1348, 7
      %v1350 = vsub.s32 0, %v1349
      %v1351 = vrot.slane %v1346, %v1350
      %v1352 = vmul.f32 %v1347, %v1351
      %v1353 = vsel %vm837, %v1352, 0.0
      %1354 = vadd.xlane.f32.xlu0 %v1353
      %v1355 = vpop.xlane.xlu0 %1354
      %v1356 = vld [vmem:[%s17] sm:$0xff]
      %v1357 = vadd.f32 %v1355, %v1356
      %v1358 = vxor.u32 %v1357, 2147483648
      %v1359 = vmul.f32 %v1358, 1.442695
      %v1360 = vpow.pop %v1359
      %v1361 = vadd.f32 %v1360, 1.0
      %v1362 = vrcp.pop %v1361
      %v1363 = vmul.f32 1.0, %v1362
      %1365 = vset.pattern.permute.xlu0 0
      %1366 = vperm.xlu0 %1365, %v1363
      %v1367 = vpop.permute.xlu0 %1366
      %v1369 = vmul.f32 %v1319, %v1367
      %1370 = vst [vmem:[#allocation3 + $0x8] sm:$0xff] %v1369
      %v1371 = vmul.f32 %v1320, %v1367
      %1372 = vst [vmem:[#allocation3 + $0x20] sm:$0xff] %v1371
      %v1373 = vmul.f32 %v1321, %v1367
      %1374 = vst [vmem:[#allocation3 + $0x38] sm:$0xff] %v1373
      %v1375 = vmul.f32 %v1322, %v1367
      %1376 = vst [vmem:[#allocation3 + $0x50] sm:$0xff] %v1375
      %v1377 = vld [vmem:[#allocation3 + $0x48] sm:$0xff]
      %v1378 = vld [vmem:[#allocation3 + $0x50] sm:$0xff]
      %1381 = vrot.lane.b32.xlu0 %v1377, 10
      %v1382 = vpop.permute.xlu0 %1381
      %1383 = vrot.lane.b32.xlu0 %v1378, 10
      %v1384 = vpop.permute.xlu0 %1383
      %v1385 = vsel %vm603, %v1382, %v1384
      %1387 = vst [vmem:[#allocation4] sm:$0xff] %v1385
      %v1388 = vld [vmem:[#allocation3 + $0x30] sm:$0xff]
      %v1389 = vld [vmem:[#allocation3 + $0x38] sm:$0xff]
      %1392 = vrot.lane.b32.xlu0 %v1388, 9
      %v1393 = vpop.permute.xlu0 %1392
      %1394 = vrot.lane.b32.xlu0 %v1389, 9
      %v1395 = vpop.permute.xlu0 %1394
      %v1396 = vsel %vm626, %v1393, %v1395
      %1398 = vst [vmem:[#allocation4 + $0x8] sm:$0xff] %v1396
      %v1399 = vld [vmem:[#allocation3 + $0x48] sm:$0xff]
      %v1400 = vld [vmem:[#allocation3 + $0x50] sm:$0xff]
      %1403 = vrot.lane.b32.xlu0 %v1399, 9
      %v1404 = vpop.permute.xlu0 %1403
      %1405 = vrot.lane.b32.xlu0 %v1400, 9
      %v1406 = vpop.permute.xlu0 %1405
      %v1407 = vsel %vm626, %v1404, %v1406
      %1409 = vst [vmem:[#allocation4 + $0x10] sm:$0xff] %v1407
      %v1410 = vld [vmem:[#allocation3 + $0x30] sm:$0xff]
      %v1411 = vld [vmem:[#allocation3 + $0x38] sm:$0xff]
      %1414 = vrot.lane.b32.xlu0 %v1410, 8
      %v1415 = vpop.permute.xlu0 %1414
      %1416 = vrot.lane.b32.xlu0 %v1411, 8
      %v1417 = vpop.permute.xlu0 %1416
      %v1418 = vsel %vm902, %v1415, %v1417
      %1420 = vst [vmem:[#allocation4 + $0x18] sm:$0xff] %v1418
      %v1421 = vld [vmem:[#allocation3 + $0x18] sm:$0xff]
      %v1422 = vld [vmem:[#allocation3 + $0x20] sm:$0xff]
      %1425 = vrot.lane.b32.xlu0 %v1421, 1
      %v1426 = vpop.permute.xlu0 %1425
      %1427 = vrot.lane.b32.xlu0 %v1422, 1
      %v1428 = vpop.permute.xlu0 %1427
      %v1429 = vsel %vm671, %v1426, %v1428
      %1431 = vst [vmem:[#allocation4 + $0x20] sm:$0xff] %v1429
      %v1432 = vld [vmem:[#allocation3 + $0x8] sm:$0xff]
      %1433 = vst [vmem:[#allocation4 + $0x28] sm:$0xff] %v1432
      %v1434 = vld [vmem:[#allocation3 + $0x20] sm:$0xff]
      %1435 = vst [vmem:[#allocation4 + $0x30] sm:$0xff] %v1434
      %v1436 = vld [vmem:[#allocation3 + $0x8] sm:$0xff]
      %v1437 = vld [vmem:[#allocation3 + $0x10] sm:$0xff]
      %1440 = vrot.lane.b32.xlu0 %v1436, 127
      %v1441 = vpop.permute.xlu0 %1440
      %1442 = vrot.lane.b32.xlu0 %v1437, 127
      %v1443 = vpop.permute.xlu0 %1442
      %v1444 = vsel %vm927, %v1441, %v1443
      %1446 = vst [vmem:[#allocation4 + $0x38] sm:$0xff] %v1444
      %v1447 = vld [vmem:[#allocation3 + $0x48] sm:$0xff]
      %v1448 = vld [vmem:[#allocation3 + $0x50] sm:$0xff]
      %1451 = vrot.lane.b32.xlu0 %v1447, 1
      %v1452 = vpop.permute.xlu0 %1451
      %1453 = vrot.lane.b32.xlu0 %v1448, 1
      %v1454 = vpop.permute.xlu0 %1453
      %v1455 = vsel %vm671, %v1452, %v1454
      %1457 = vst [vmem:[#allocation4 + $0x40] sm:$0xff] %v1455
      %v1458 = vld [vmem:[#allocation3 + $0x38] sm:$0xff]
      %1459 = vst [vmem:[#allocation4 + $0x48] sm:$0xff] %v1458
      %v1460 = vld [vmem:[#allocation3 + $0x50] sm:$0xff]
      %1461 = vst [vmem:[#allocation4 + $0x50] sm:$0xff] %v1460
      %v1462 = vld [vmem:[#allocation3 + $0x38] sm:$0xff]
      %v1463 = vld [vmem:[#allocation3 + $0x40] sm:$0xff]
      %1466 = vrot.lane.b32.xlu0 %v1462, 127
      %v1467 = vpop.permute.xlu0 %1466
      %1468 = vrot.lane.b32.xlu0 %v1463, 127
      %v1469 = vpop.permute.xlu0 %1468
      %v1470 = vsel %vm927, %v1467, %v1469
      %1472 = vst [vmem:[#allocation4 + $0x58] sm:$0xff] %v1470
      %v1473 = vld [vmem:[#allocation3 + $0x20] sm:$0xff]
      %v1474 = vld [vmem:[#allocation3 + $0x28] sm:$0xff]
      %1477 = vrot.lane.b32.xlu0 %v1473, 120
      %v1478 = vpop.permute.xlu0 %1477
      %1479 = vrot.lane.b32.xlu0 %v1474, 120
      %v1480 = vpop.permute.xlu0 %1479
      %v1481 = vsel %vm939, %v1478, %v1480
      %1483 = vst [vmem:[#allocation4 + $0x60] sm:$0xff] %v1481
      %v1484 = vld [vmem:[#allocation3 + $0x8] sm:$0xff]
      %v1485 = vld [vmem:[#allocation3 + $0x10] sm:$0xff]
      %1488 = vrot.lane.b32.xlu0 %v1484, 119
      %v1489 = vpop.permute.xlu0 %1488
      %1490 = vrot.lane.b32.xlu0 %v1485, 119
      %v1491 = vpop.permute.xlu0 %1490
      %v1492 = vsel %vm951, %v1489, %v1491
      %1494 = vst [vmem:[#allocation4 + $0x68] sm:$0xff] %v1492
      %v1495 = vld [vmem:[#allocation3 + $0x20] sm:$0xff]
      %v1496 = vld [vmem:[#allocation3 + $0x28] sm:$0xff]
      %1499 = vrot.lane.b32.xlu0 %v1495, 119
      %v1500 = vpop.permute.xlu0 %1499
      %1501 = vrot.lane.b32.xlu0 %v1496, 119
      %v1502 = vpop.permute.xlu0 %1501
      %v1503 = vsel %vm951, %v1500, %v1502
      %1505 = vst [vmem:[#allocation4 + $0x70] sm:$0xff] %v1503
      %v1506 = vld [vmem:[#allocation3 + $0x8] sm:$0xff]
      %v1507 = vld [vmem:[#allocation3 + $0x10] sm:$0xff]
      %1510 = vrot.lane.b32.xlu0 %v1506, 118
      %v1511 = vpop.permute.xlu0 %1510
      %1512 = vrot.lane.b32.xlu0 %v1507, 118
      %v1513 = vpop.permute.xlu0 %1512
      %v1514 = vsel %vm963, %v1511, %v1513
      %1516 = vst [vmem:[#allocation4 + $0x78] sm:$0xff] %v1514
      %v1517 = vld [vmem:[%s8] sm:$0xff]
      %v1518 = vld [vmem:[%s8 + $0x8] sm:$0xff]
      %v1519 = vld [vmem:[%s8 + $0x10] sm:$0xff]
      %v1520 = vld [vmem:[%s8 + $0x18] sm:$0xff]
      %v1521 = vld [vmem:[%s8 + $0x20] sm:$0xff]
      %v1522 = vld [vmem:[%s8 + $0x28] sm:$0xff]
      %v1523 = vld [vmem:[%s8 + $0x30] sm:$0xff]
      %v1524 = vld [vmem:[%s8 + $0x38] sm:$0xff]
      %v1525 = vld [vmem:[#allocation4] sm:$0xff]
      %v1526 = vld [vmem:[#allocation4 + $0x8] sm:$0xff]
      %v1527 = vld [vmem:[#allocation4 + $0x10] sm:$0xff]
      %v1528 = vld [vmem:[#allocation4 + $0x18] sm:$0xff]
      %v1529 = vld [vmem:[#allocation4 + $0x20] sm:$0xff]
      %v1530 = vld [vmem:[#allocation4 + $0x28] sm:$0xff]
      %v1531 = vld [vmem:[#allocation4 + $0x30] sm:$0xff]
      %v1532 = vld [vmem:[#allocation4 + $0x38] sm:$0xff]
      %v1533 = vld [vmem:[#allocation4 + $0x40] sm:$0xff]
      %v1534 = vld [vmem:[#allocation4 + $0x48] sm:$0xff]
      %v1535 = vld [vmem:[#allocation4 + $0x50] sm:$0xff]
      %v1536 = vld [vmem:[#allocation4 + $0x58] sm:$0xff]
      %v1537 = vld [vmem:[#allocation4 + $0x60] sm:$0xff]
      %v1538 = vld [vmem:[#allocation4 + $0x68] sm:$0xff]
      %v1539 = vld [vmem:[#allocation4 + $0x70] sm:$0xff]
      %v1540 = vld [vmem:[#allocation4 + $0x78] sm:$0xff]
      %v1541 = vld [vmem:[%s9] sm:$0xff]
      %v1542 = vld [vmem:[%s9 + $0x8] sm:$0xff]
      %v1543 = vld [vmem:[%s9 + $0x10] sm:$0xff]
      %v1544 = vld [vmem:[%s9 + $0x18] sm:$0xff]
      %v1545 = vld [vmem:[%s9 + $0x20] sm:$0xff]
      %v1546 = vld [vmem:[%s9 + $0x28] sm:$0xff]
      %v1547 = vld [vmem:[%s9 + $0x30] sm:$0xff]
      %v1548 = vld [vmem:[%s9 + $0x38] sm:$0xff]
      %1550 = vset.pattern.permute.xlu0 0
      %1551 = vperm.xlu0 %1550, %v1541
      %v1552 = vpop.permute.xlu0 %1551
      %1555 = vset.pattern.permute.xlu0 0
      %1556 = vperm.xlu0 %1555, %v1542
      %v1557 = vpop.permute.xlu0 %1556
      %1560 = vset.pattern.permute.xlu0 0
      %1561 = vperm.xlu0 %1560, %v1543
      %v1562 = vpop.permute.xlu0 %1561
      %1565 = vset.pattern.permute.xlu0 0
      %1566 = vperm.xlu0 %1565, %v1544
      %v1567 = vpop.permute.xlu0 %1566
      %1570 = vset.pattern.permute.xlu0 0
      %1571 = vperm.xlu0 %1570, %v1545
      %v1572 = vpop.permute.xlu0 %1571
      %1575 = vset.pattern.permute.xlu0 0
      %1576 = vperm.xlu0 %1575, %v1546
      %v1577 = vpop.permute.xlu0 %1576
      %1580 = vset.pattern.permute.xlu0 0
      %1581 = vperm.xlu0 %1580, %v1547
      %v1582 = vpop.permute.xlu0 %1581
      %1585 = vset.pattern.permute.xlu0 0
      %1586 = vperm.xlu0 %1585, %v1548
      %v1587 = vpop.permute.xlu0 %1586
      %1589 = vmatprep.subr.mxu0 0.0
      %1590 = vmatpush1.msra.mxu0 %v1540
      %1591 = vmatprep.subr.mxu0 0.0
      %1592 = vmatpush1.msra.mxu0 %v1539
      %1593 = vmatprep.subr.mxu0 0.0
      %1594 = vmatpush1.msra.mxu0 %v1538
      %1595 = vmatprep.subr.mxu0 0.0
      %1596 = vmatpush1.msra.mxu0 %v1537
      %1597 = vmatprep.subr.mxu0 0.0
      %1598 = vmatpush1.msra.mxu0 %v1536
      %1599 = vmatprep.subr.mxu0 0.0
      %1600 = vmatpush1.msra.mxu0 %v1535
      %1601 = vmatprep.subr.mxu0 0.0
      %1602 = vmatpush1.msra.mxu0 %v1534
      %1603 = vmatprep.subr.mxu0 0.0
      %1604 = vmatpush1.msra.mxu0 %v1533
      %1605 = vmatprep.subr.mxu0 0.0
      %1606 = vmatpush1.msra.mxu0 %v1532
      %1607 = vmatprep.subr.mxu0 0.0
      %1608 = vmatpush1.msra.mxu0 %v1531
      %1609 = vmatprep.subr.mxu0 0.0
      %1610 = vmatpush1.msra.mxu0 %v1530
      %1611 = vmatprep.subr.mxu0 0.0
      %1612 = vmatpush1.msra.mxu0 %v1529
      %1613 = vmatprep.subr.mxu0 0.0
      %1614 = vmatpush1.msra.mxu0 %v1528
      %1615 = vmatprep.subr.mxu0 0.0
      %1616 = vmatpush1.msra.mxu0 %v1527
      %1617 = vmatprep.subr.mxu0 0.0
      %1618 = vmatpush1.msra.mxu0 %v1526
      %1619 = vmatprep.subr.mxu0 0.0
      %1620 = vmatpush1.msra.mxu0 %v1525
      %1621 = vmatprep.subr.mxu0 0.0
      %1622 = vmatpush2.msra.mxu0 0.0
      %1623 = vmatprep.subr.mxu0 0.0
      %1624 = vmatpush2.msra.mxu0 0.0
      %1625 = vmatprep.subr.mxu0 0.0
      %1626 = vmatpush2.msra.mxu0 0.0
      %1627 = vmatprep.subr.mxu0 0.0
      %1628 = vmatpush2.msra.mxu0 0.0
      %1629 = vmatprep.subr.mxu0 0.0
      %1630 = vmatpush2.msra.mxu0 0.0
      %1631 = vmatprep.subr.mxu0 0.0
      %1632 = vmatpush2.msra.mxu0 0.0
      %1633 = vmatprep.subr.mxu0 0.0
      %1634 = vmatpush2.msra.mxu0 0.0
      %1635 = vmatprep.subr.mxu0 0.0
      %1636 = vmatpush2.msra.mxu0 0.0
      %1637 = vmatprep.subr.mxu0 0.0
      %1638 = vmatpush2.msra.mxu0 0.0
      %1639 = vmatprep.subr.mxu0 0.0
      %1640 = vmatpush2.msra.mxu0 0.0
      %1641 = vmatprep.subr.mxu0 0.0
      %1642 = vmatpush2.msra.mxu0 0.0
      %1643 = vmatprep.subr.mxu0 0.0
      %1644 = vmatpush2.msra.mxu0 0.0
      %1645 = vmatprep.subr.mxu0 0.0
      %1646 = vmatpush2.msra.mxu0 0.0
      %1647 = vmatprep.subr.mxu0 0.0
      %1648 = vmatpush2.msra.mxu0 0.0
      %1649 = vmatprep.subr.mxu0 0.0
      %1650 = vmatpush2.msra.mxu0 0.0
      %1651 = vmatprep.subr.mxu0 0.0
      %1652 = vmatpush2.msra.mxu0 0.0
      %1653 = vmatprep.mubr.f32.mxu0 0.0
      %1654 = vmatmul.mubr.f32.gmra.mxu0 %v1517
      %v1655 = vpop.f32.mrf.mxu0
      %v1656 = vadd.f32 %v1552, %v1655
      %v1657 = vpop.f32.mrf.mxu0
      %1658 = vmatprep.mubr.f32.mxu0 0.0
      %1659 = vmatmul.mubr.f32.gmra.mxu0 %v1518
      %v1660 = vpop.f32.mrf.mxu0
      %v1661 = vadd.f32 %v1557, %v1660
      %v1662 = vpop.f32.mrf.mxu0
      %1663 = vmatprep.mubr.f32.mxu0 0.0
      %1664 = vmatmul.mubr.f32.gmra.mxu0 %v1519
      %v1665 = vpop.f32.mrf.mxu0
      %v1666 = vadd.f32 %v1562, %v1665
      %v1667 = vpop.f32.mrf.mxu0
      %1668 = vmatprep.mubr.f32.mxu0 0.0
      %1669 = vmatmul.mubr.f32.gmra.mxu0 %v1520
      %v1670 = vpop.f32.mrf.mxu0
      %v1671 = vadd.f32 %v1567, %v1670
      %v1672 = vpop.f32.mrf.mxu0
      %1673 = vmatprep.mubr.f32.mxu0 0.0
      %1674 = vmatmul.mubr.f32.gmra.mxu0 %v1521
      %v1675 = vpop.f32.mrf.mxu0
      %v1676 = vadd.f32 %v1572, %v1675
      %v1677 = vpop.f32.mrf.mxu0
      %1678 = vmatprep.mubr.f32.mxu0 0.0
      %1679 = vmatmul.mubr.f32.gmra.mxu0 %v1522
      %v1680 = vpop.f32.mrf.mxu0
      %v1681 = vadd.f32 %v1577, %v1680
      %v1682 = vpop.f32.mrf.mxu0
      %1683 = vmatprep.mubr.f32.mxu0 0.0
      %1684 = vmatmul.mubr.f32.gmra.mxu0 %v1523
      %v1685 = vpop.f32.mrf.mxu0
      %v1686 = vadd.f32 %v1582, %v1685
      %v1687 = vpop.f32.mrf.mxu0
      %1688 = vmatprep.mubr.f32.mxu0 0.0
      %1689 = vmatmul.mubr.f32.gmra.mxu0 %v1524
      %v1690 = vpop.f32.mrf.mxu0
      %v1691 = vadd.f32 %v1587, %v1690
      %v1692 = vpop.f32.mrf.mxu0
      %1693 = vdwg.mxu0
      %v1694 = vld [vmem:[%s570 + $0x8] sm:$0xff]
      %v1695 = vld [vmem:[%s570 + $0x20] sm:$0xff]
      %v1696 = vld [vmem:[%s570 + $0x38] sm:$0xff]
      %v1697 = vld [vmem:[%s570 + $0x50] sm:$0xff]
      %v1698 = vld [vmem:[%s570 + $0x68] sm:$0xff]
      %v1699 = vld [vmem:[%s570 + $0x80] sm:$0xff]
      %v1700 = vld [vmem:[%s570 + $0x98] sm:$0xff]
      %v1701 = vld [vmem:[%s570 + $0xb0] sm:$0xff]
      %v1702 = vadd.f32 %v1656, %v1694
      %v1703 = vadd.f32 %v1661, %v1695
      %v1704 = vadd.f32 %v1666, %v1696
      %v1705 = vadd.f32 %v1671, %v1697
      %v1706 = vadd.f32 %v1676, %v1698
      %v1707 = vadd.f32 %v1681, %v1699
      %v1708 = vadd.f32 %v1686, %v1700
      %v1709 = vadd.f32 %v1691, %v1701
      %1710 = vst [vmem:[%s575] sm:$0xff] %v1702
      %1711 = vst [vmem:[%s575 + $0x8] sm:$0xff] %v1703
      %1712 = vst [vmem:[%s575 + $0x10] sm:$0xff] %v1704
      %1713 = vst [vmem:[%s575 + $0x18] sm:$0xff] %v1705
      %1714 = vst [vmem:[%s575 + $0x20] sm:$0xff] %v1706
      %1715 = vst [vmem:[%s575 + $0x28] sm:$0xff] %v1707
      %1716 = vst [vmem:[%s575 + $0x30] sm:$0xff] %v1708
      %1717 = vst [vmem:[%s575 + $0x38] sm:$0xff] %v1709
      %p1718 = scmp.lt.s32.totalorder %s29, 1
      %s1719 = scalar_select %p1718, %s29, 1
      %s1720 = smul.addr %s1719, 8
      %s1721 = smul.addr %s1720, 8
      %s1722 = scalar_lea.vmem %s18, %s1721
      // Predicated region
      $region93: #{symmetric_forward.1} parent=91 // pred_check
        %p1723 = pneg %p430
      $region94: #{symmetric_forward.1} parent=91 // pred_check_branch
        %1725 = sbr.rel (%p1723) target = $region96
      $region95: #{symmetric_forward.1} parent=91 // pred_region
        _
      $region96: #{symmetric_forward.1} parent=91 // pred_fallthru
        _
    $region92: #{symmetric_forward.1} parent=5 // pred_fallthru
      _
    %p1726 = scmp.le.s32.totalorder 2, %s24
    // Predicated region
    $region97: #{symmetric_forward.1} parent=5 // pred_check
      %p1727 = pneg %p1726
    $region98: #{symmetric_forward.1} parent=5 // pred_check_branch
      %1729 = sbr.rel (%p1727) target = $region100
    $region99: #{symmetric_forward.1} parent=5 // pred_region
      %s1730 = ssub.s32 %s24, 2
      // Predicated region
      $region101: #{symmetric_forward.1} parent=99 // pred_check
        %p1731 = pneg %p436
      $region102: #{symmetric_forward.1} parent=99 // pred_check_branch
        %1733 = sbr.rel (%p1731) target = $region104
      $region103: #{symmetric_forward.1} parent=99 // pred_region
        %p1734 = scmp.lt.s32.totalorder %s30, 1
        %s1735 = scalar_select %p1734, %s30, 1
        %s1736 = smul.addr %s1735, 8
        %s1737 = smul.addr %s1736, 8
        %s1738 = scalar_lea.vmem %s18, %s1737
      $region104: #{symmetric_forward.1} parent=99 // pred_fallthru
        _
    $region100: #{symmetric_forward.1} parent=5 // pred_fallthru
      _
  $region6: #{symmetric_forward.1} parent=0 // loop_footer
    %s28 = sadd.s32 1, %s24
  $region7: #{symmetric_forward.1} parent=0 // loop_footer_branch
    %23 = sbr.rel target = $region3
  $region8: #{symmetric_forward.1} parent=0 // loop_exit
    _

</llo_original>
